<compile_context>
chip_gen: v7x
topology: tpu7x:2x2x1
jax: 0.10.0
libtpu: 0.0.40
codegen_flags: <defaults>
</compile_context>

<pallas_src>
import math

import jax
import jax.numpy as jnp
from jax.experimental import pallas as pl
from jax.experimental.pallas import tpu as pltpu

HIDDEN = 1000   # nn.Linear(image_feature_output, 1000)
OUT = 3         # nn.Linear(1000, 3)


def _round_up(x, m):
    return ((x + m - 1) // m) * m


def _pick_compute_dtype():
    """bf16 matmul/tanh on v6e/v7x (bf16 MXU fast path + bf16 EUP); f32 on older gens."""
    try:
        kind = jax.devices()[0].device_kind.lower()
    except Exception:
        return jnp.bfloat16
    if any(tag in kind for tag in ("v2", "v3", "v4", "v5")):
        return jnp.float32
    return jnp.bfloat16


def prepare_params(w1, b1, w2, b2, compute_dtype=None):
    """One-time parameter prep (NOT per forward call):
       - hidden width padded 1000 -> 1024 (lane multiple),
       - output width padded 3 -> 128 (zero columns, exact),
       - matmul operands pre-cast to the MXU compute dtype."""
    if compute_dtype is None:
        compute_dtype = _pick_compute_dtype()
    D, H = w1.shape
    O = w2.shape[1]
    Hp = _round_up(H, 128)
    Np = _round_up(max(O, 128), 128)

    w1p = jnp.pad(w1.astype(jnp.float32), ((0, 0), (0, Hp - H))).astype(compute_dtype)
    b1p = jnp.pad(b1.astype(jnp.float32).reshape(1, H), ((0, 0), (0, Hp - H)))
    w2p = jnp.pad(w2.astype(jnp.float32), ((0, Hp - H), (0, Np - O))).astype(compute_dtype)
    b2p = jnp.pad(b2.astype(jnp.float32).reshape(1, O), ((0, 0), (0, Np - O)))
    return {"w1": w1p, "b1": b1p, "w2": w2p, "b2": b2p}


def _pick_tile_b(B, D):
    """Batch tile: multiple of 128 (lane-dense transposed output store), fatter when D is
    small (amortize per-step overhead), and >=2 grid steps when B allows (v7x megacore)."""
    if D <= 256:
        req = 2048
    elif D <= 2048:
        req = 512
    else:
        req = 256
    tile = min(req, _round_up(B, 128))
    if B > 128 and pl.cdiv(B, tile) < 2:
        tile = _round_up(pl.cdiv(B, 2), 128)
    return max(tile, 128)


def _estimate_vmem_bytes(D, Hp, Np, tile_b, x_itemsize, w_itemsize, out_itemsize):
    """Rough upper bound: double-buffered resident weights + double-buffered x/out tiles
    + main intermediates (pre/post-tanh h, y, y^T)."""
    weights = D * Hp * w_itemsize + Hp * 4 + Hp * Np * w_itemsize + Np * 4
    io = 2 * tile_b * D * x_itemsize + 2 * Np * tile_b * out_itemsize
    inter = tile_b * Hp * (4 + 2 * w_itemsize) + 2 * tile_b * Np * 4
    return 2 * weights + io + inter + (2 << 20)


def _ac_header_kernel(x_ref, w1_ref, b1_ref, w2_ref, b2_ref, o_ref):
    # x_ref:  (TB, D)    input tile (native dtype)
    # w1_ref: (D, Hp)    first linear weight, pre-cast to compute dtype, hidden padded
    # b1_ref: (1, Hp)    first linear bias (f32, zero-padded)
    # w2_ref: (Hp, Np)   second linear weight, compute dtype, zero-padded to 128 columns
    # b2_ref: (1, Np)    second linear bias (f32, zero-padded)
    # o_ref:  (O, TB)    transposed (lane-dense) output tile
    act_dtype = w1_ref.dtype
    x = x_ref[...].astype(act_dtype)

    # ---- Linear 1 on the MXU (bf16 inputs on v6e/v7x), f32 accumulate ----
    h = jnp.dot(x, w1_ref[...], preferred_element_type=jnp.float32)
    h = h + b1_ref[...]

    # Dropout(p=0.5) is identity at inference.
    # TODO(synk): training-mode dropout (pltpu.prng_* based masking) intentionally omitted.

    # ---- Tanh on the EUP (bf16 on v6e/v7x; f32 on older gens); keep h in act dtype ----
    h = jnp.tanh(h.astype(act_dtype))

    # ---- Linear 2 (1000 -> 3) on the MXU with N zero-padded to 128 lanes (exact) ----
    y = jnp.dot(h, w2_ref[...], preferred_element_type=jnp.float32)   # (TB, Np) f32
    y = y + b2_ref[...]

    # ---- Lane-dense output: aligned XLU transpose, slice the 3 real rows, sigmoid ----
    yt = jnp.transpose(y)                          # (Np, TB), both dims (8,128)-aligned
    z = jax.nn.sigmoid(yt[: o_ref.shape[0], :])    # (O, TB)
    o_ref[...] = z.astype(o_ref.dtype)


@jax.jit
def ac_header_forward(hidden_states, w1p, b1p, w2p, b2p):
    """hidden_states: [..., D] -> output: [..., 3] (eval-mode forward).
    w1p/b1p/w2p/b2p must come from prepare_params (pre-padded, pre-cast)."""
    orig_shape = hidden_states.shape
    D = orig_shape[-1]
    x = hidden_states.reshape(-1, D)
    B = x.shape[0]
    Hp = w1p.shape[1]
    Np = w2p.shape[1]
    O = OUT

    tile_b = _pick_tile_b(B, D)
    grid_b = pl.cdiv(B, tile_b)

    est = _estimate_vmem_bytes(D, Hp, Np, tile_b,
                               hidden_states.dtype.itemsize,
                               w1p.dtype.itemsize,
                               hidden_states.dtype.itemsize)
    vmem_limit = int(min(est, 64 << 20)) if est > (16 << 20) else None

    out_t = pl.pallas_call(
        _ac_header_kernel,
        out_shape=jax.ShapeDtypeStruct((O, B), hidden_states.dtype),
        grid=(grid_b,),
        in_specs=[
            pl.BlockSpec((tile_b, D), lambda i: (i, 0)),   # x tile
            pl.BlockSpec((D, Hp), lambda i: (0, 0)),       # w1 (resident)
            pl.BlockSpec((1, Hp), lambda i: (0, 0)),       # b1 (resident)
            pl.BlockSpec((Hp, Np), lambda i: (0, 0)),      # w2 (resident, padded cols)
            pl.BlockSpec((1, Np), lambda i: (0, 0)),       # b2 (resident)
        ],
        out_specs=pl.BlockSpec((O, tile_b), lambda i: (0, i)),   # lane-dense transposed out
        compiler_params=pltpu.CompilerParams(
            dimension_semantics=("parallel",),
            vmem_limit_bytes=vmem_limit,
        ),
    )(x, w1p, b1p, w2p, b2p)

    return jnp.transpose(out_t).reshape(orig_shape[:-1] + (O,))


def init_params(key, in_features, hidden=HIDDEN, out_features=OUT):
    """Deterministic init mimicking PyTorch nn.Linear default (uniform +-1/sqrt(fan_in)).
    Weights stored transposed ([in, out]) so the kernel computes plain x @ W."""
    k1, k2, k3, k4 = jax.random.split(key, 4)
    bound1 = 1.0 / math.sqrt(in_features)
    bound2 = 1.0 / math.sqrt(hidden)
    w1 = jax.random.uniform(k1, (in_features, hidden), jnp.float32, -bound1, bound1)
    b1 = jax.random.uniform(k2, (hidden,), jnp.float32, -bound1, bound1)
    w2 = jax.random.uniform(k3, (hidden, out_features), jnp.float32, -bound2, bound2)
    b2 = jax.random.uniform(k4, (out_features,), jnp.float32, -bound2, bound2)
    return w1, b1, w2, b2


if __name__ == "__main__":
    key = jax.random.PRNGKey(0)
    k_in, k_param = jax.random.split(key)

    # args.model_config['image_feature_output'] -> 32 (small synthetic size)
    in_features = 32
    hidden_states = jax.random.normal(k_in, (2, 8, in_features), jnp.float32)

    w1, b1, w2, b2 = init_params(k_param, in_features)
    params = prepare_params(w1, b1, w2, b2)   # one-time prep (pad + cast)

    out = ac_header_forward(hidden_states, params["w1"], params["b1"],
                            params["w2"], params["b2"])
    out = jax.block_until_ready(out)

    # Reference (plain JAX, f32, eval-mode dropout == identity).
    ref = jax.nn.sigmoid(jnp.tanh(hidden_states @ w1 + b1) @ w2 + b2)

    # Tolerance depends on whether the kernel ran the bf16 path (v6e/v7x) or f32 (older).
    atol = 3e-2 if params["w1"].dtype == jnp.bfloat16 else 2e-4

    assert out.shape == (2, 8, OUT), out.shape
    max_err = float(jnp.max(jnp.abs(out.astype(jnp.float32) - ref)))
    assert max_err < atol, max_err

    print("KERNEL_OK")
</pallas_src>

<mosaic_0001>
module attributes {stable_mosaic.version = 11 : i64} {
  func.func @_ac_header_kernel(%arg0: i32, %arg1: memref<128x32xf32, #tpu.memory_space<vmem>>, %arg2: memref<32x1024xbf16, #tpu.memory_space<vmem>>, %arg3: memref<1x1024xf32, #tpu.memory_space<vmem>>, %arg4: memref<1024x128xbf16, #tpu.memory_space<vmem>>, %arg5: memref<1x128xf32, #tpu.memory_space<vmem>>, %arg6: memref<3x128xf32, #tpu.memory_space<vmem>>) attributes {dimension_semantics = [#tpu.dimension_semantics<parallel>], iteration_bounds = array<i64: 1>, scalar_prefetch = 0 : i64, scratch_operands = 0 : i64, tpu.core_type = #tpu.core_type<tc>, window_params = [{transform_indices = @transform_0, window_bounds = array<i64: 128, 32>}, {pipeline_mode = #tpu.pipeline_mode<synchronous>, transform_indices = @transform_1, window_bounds = array<i64: 32, 1024>}, {pipeline_mode = #tpu.pipeline_mode<synchronous>, transform_indices = @transform_2, window_bounds = array<i64: 1, 1024>}, {pipeline_mode = #tpu.pipeline_mode<synchronous>, transform_indices = @transform_3, window_bounds = array<i64: 1024, 128>}, {pipeline_mode = #tpu.pipeline_mode<synchronous>, transform_indices = @transform_4, window_bounds = array<i64: 1, 128>}, {transform_indices = @transform_5, window_bounds = array<i64: 3, 128>}]} {
    %c0 = arith.constant 0 : index
    %c0_0 = arith.constant 0 : index
    %0 = vector.load %arg1[%c0, %c0_0] : memref<128x32xf32, #tpu.memory_space<vmem>>, vector<128x32xf32>
    %1 = arith.truncf %0 : vector<128x32xf32> to vector<128x32xbf16>
    %c0_1 = arith.constant 0 : index
    %c0_2 = arith.constant 0 : index
    %2 = vector.load %arg2[%c0_1, %c0_2] : memref<32x1024xbf16, #tpu.memory_space<vmem>>, vector<32x1024xbf16>
    %cst = arith.constant dense<0.000000e+00> : vector<128x1024xf32>
    %3 = tpu.matmul %1, %2, %cst {dimension_numbers = #tpu.dot_dimension_numbers<[1], [0], [0], [1], [0, 0, 1, 1], [], []>} : vector<128x32xbf16>, vector<32x1024xbf16>, vector<128x1024xf32> -> vector<128x1024xf32>
    %c0_3 = arith.constant 0 : index
    %c0_4 = arith.constant 0 : index
    %4 = vector.load %arg3[%c0_3, %c0_4] : memref<1x1024xf32, #tpu.memory_space<vmem>>, vector<1x1024xf32>
    %5 = vector.broadcast %4 : vector<1x1024xf32> to vector<128x1024xf32>
    %6 = arith.addf %3, %5 : vector<128x1024xf32>
    %7 = arith.truncf %6 : vector<128x1024xf32> to vector<128x1024xbf16>
    %8 = math.tanh %7 : vector<128x1024xbf16>
    %c0_5 = arith.constant 0 : index
    %c0_6 = arith.constant 0 : index
    %9 = vector.load %arg4[%c0_5, %c0_6] : memref<1024x128xbf16, #tpu.memory_space<vmem>>, vector<1024x128xbf16>
    %cst_7 = arith.constant dense<0.000000e+00> : vector<128x128xf32>
    %10 = tpu.matmul %8, %9, %cst_7 {dimension_numbers = #tpu.dot_dimension_numbers<[1], [0], [0], [1], [0, 0, 1, 1], [], []>} : vector<128x1024xbf16>, vector<1024x128xbf16>, vector<128x128xf32> -> vector<128x128xf32>
    %c0_8 = arith.constant 0 : index
    %c0_9 = arith.constant 0 : index
    %11 = vector.load %arg5[%c0_8, %c0_9] : memref<1x128xf32, #tpu.memory_space<vmem>>, vector<1x128xf32>
    %12 = vector.broadcast %11 : vector<1x128xf32> to vector<128x128xf32>
    %13 = arith.addf %10, %12 : vector<128x128xf32>
    %14 = tpu.transpose %13, [1, 0] : vector<128x128xf32> -> vector<128x128xf32>
    %15 = vector.extract_strided_slice %14 {offsets = [0, 0], sizes = [3, 128], strides = [1, 1]} : vector<128x128xf32> to vector<3x128xf32>
    %16 = arith.negf %15 : vector<3x128xf32>
    %17 = math.exp %16 : vector<3x128xf32>
    %cst_10 = arith.constant 1.000000e+00 : f32
    %18 = vector.broadcast %cst_10 : f32 to vector<3x128xf32>
    %19 = arith.addf %18, %17 : vector<3x128xf32>
    %20 = arith.divf %18, %19 : vector<3x128xf32>
    %c0_11 = arith.constant 0 : index
    %c0_12 = arith.constant 0 : index
    %21 = vector.load %arg6[%c0_11, %c0_12] : memref<3x128xf32, #tpu.memory_space<vmem>>, vector<3x128xf32>
    tpu.vector_store %arg6[%c0_11, %c0_12], %20 {strides = array<i32>} : memref<3x128xf32, #tpu.memory_space<vmem>>, vector<3x128xf32>,
    return
  }
  func.func @transform_0(%arg0: i32) -> (i32, i32) {
    %c0_i32 = arith.constant 0 : i32
    %c0_i32_0 = arith.constant 0 : i32
    return %arg0, %c0_i32 : i32, i32
  }
  func.func @transform_1(%arg0: i32) -> (i32, i32) {
    %c0_i32 = arith.constant 0 : i32
    %c0_i32_0 = arith.constant 0 : i32
    %c0_i32_1 = arith.constant 0 : i32
    return %c0_i32, %c0_i32_0 : i32, i32
  }
  func.func @transform_2(%arg0: i32) -> (i32, i32) {
    %c0_i32 = arith.constant 0 : i32
    %c0_i32_0 = arith.constant 0 : i32
    %c0_i32_1 = arith.constant 0 : i32
    return %c0_i32, %c0_i32_0 : i32, i32
  }
  func.func @transform_3(%arg0: i32) -> (i32, i32) {
    %c0_i32 = arith.constant 0 : i32
    %c0_i32_0 = arith.constant 0 : i32
    %c0_i32_1 = arith.constant 0 : i32
    return %c0_i32, %c0_i32_0 : i32, i32
  }
  func.func @transform_4(%arg0: i32) -> (i32, i32) {
    %c0_i32 = arith.constant 0 : i32
    %c0_i32_0 = arith.constant 0 : i32
    %c0_i32_1 = arith.constant 0 : i32
    return %c0_i32, %c0_i32_0 : i32, i32
  }
  func.func @transform_5(%arg0: i32) -> (i32, i32) {
    %c0_i32 = arith.constant 0 : i32
    %c0_i32_0 = arith.constant 0 : i32
    return %c0_i32, %arg0 : i32, i32
  }
}

</mosaic_0001>

<llo_original>
// kernel: ac_header_forward.1
$region0: #{ac_header_forward.1}
  #allocation0 [shape = 'u32[]', space=smem, size = 0x4, offset = 0x4, fixed_abs, tag = 'smem constant byte address 0x4 - core index']
  #allocation1 [shape = 'u32[144,128]{1,0:T(1,128)}', space=vmem, size = 0x12000, scoped, tag = 'internal scratch']
  %s0 = inlined_call_operand.hbm [shape: f32[16,32], index: 0, kind: input, shape index: {}]
  %s1 = inlined_call_operand.hbm [shape: bf16[32,1024], index: 1, kind: input, shape index: {}]
  %s2 = inlined_call_operand.vmem [shape: f32[1,1024], index: 2, kind: input, shape index: {}]
  %s3 = inlined_call_operand.hbm [shape: bf16[1024,128], index: 3, kind: input, shape index: {}]
  %s4 = inlined_call_operand.vmem [shape: f32[1,128], index: 4, kind: input, shape index: {}]
  %s5 = inlined_call_operand.vmem [shape: f32[3,16], index: 5, kind: output, shape index: {}]
  %s6 = sld [smem:[#allocation0]]
  $region42: #{ac_header_forward.1} parent=0
    _
  %s8 = ssub.s32 1, %s6
  %s9 = scalar_select 0, %s8, %s6
  $region1: #{ac_header_forward.1} parent=0
    #allocation2 [shape = 'u8[65536]{0}', space=vmem, size = 0x10000, scoped, tag = 'input window, operand 0, single buffered']
    #allocation3 [shape = 's32[1]{0}', space=sflag, size = 0x4, scoped, tag = 'scoped memory for ac_header_forward.1']
    #allocation4 [shape = 'u8[65536]{0}', space=vmem, size = 0x10000, scoped, tag = 'input window, operand 1, single buffered']
    #allocation5 [shape = 's32[1]{0}', space=sflag, size = 0x4, scoped, tag = 'scoped memory for ac_header_forward.1']
    #allocation6 [shape = 'u8[262144]{0}', space=vmem, size = 0x40000, scoped, tag = 'input window, operand 3, single buffered']
    %10 = vsyncpa [#allocation3], 0
    %11 = vsyncpa [#allocation5], 0
    // Predicated region
    $region2: #{ac_header_forward.1} parent=1 // pred_check
      _
    $region3: #{ac_header_forward.1} parent=1 // pred_check_branch
      %13 = sbr.rel (0) target = $region5
    $region4: #{ac_header_forward.1} parent=1 // pred_region
      %s15 = ssub.s32 2048, 256
      %16 = vsyncadd [#allocation3], %s15
      %s17 = sshll.u32 [#allocation2], 4
      %s18 = int_to_ptr.vmem [resolvable:$true] %s17
      %23 = dma.hbm_to_vmem [thread:$0]  %s0, 256, %s18, [#allocation3], 128, 128, 8
    $region5: #{ac_header_forward.1} parent=1 // pred_fallthru
      _
    // Predicated region
    $region6: #{ac_header_forward.1} parent=1 // pred_check
      _
    $region7: #{ac_header_forward.1} parent=1 // pred_check_branch
      %25 = sbr.rel (0) target = $region9
    $region8: #{ac_header_forward.1} parent=1 // pred_region
      %s27 = ssub.s32 2048, 2048
      %28 = vsyncadd [#allocation5], %s27
      %s29 = sshll.u32 [#allocation4], 4
      %s30 = int_to_ptr.vmem [resolvable:$true] %s29
      %35 = dma.hbm_to_vmem [thread:$0]  %s1, 2048, %s30, [#allocation5], 512, 512, 32
    $region9: #{ac_header_forward.1} parent=1 // pred_fallthru
      _
    // Predicated region
    $region10: #{ac_header_forward.1} parent=1 // pred_check
      _
    $region11: #{ac_header_forward.1} parent=1 // pred_check_branch
      %37 = sbr.rel (0) target = $region13
    $region12: #{ac_header_forward.1} parent=1 // pred_region
      _
    $region13: #{ac_header_forward.1} parent=1 // pred_fallthru
      _
    // Predicated region
    $region14: #{ac_header_forward.1} parent=1 // pred_check
      _
    $region15: #{ac_header_forward.1} parent=1 // pred_check_branch
      %39 = sbr.rel (0) target = $region17
    $region16: #{ac_header_forward.1} parent=1 // pred_region
      %s41 = ssub.s32 8192, 8192
      %42 = vsyncadd [#allocation5], %s41
      %s43 = sshll.u32 [#allocation6], 4
      %s44 = int_to_ptr.vmem [resolvable:$true] %s43
      %49 = dma.hbm_to_vmem [thread:$0]  %s3, 8192, %s44, [#allocation5], 64, 64, 4
    $region17: #{ac_header_forward.1} parent=1 // pred_fallthru
      _
    // Predicated region
    $region18: #{ac_header_forward.1} parent=1 // pred_check
      _
    $region19: #{ac_header_forward.1} parent=1 // pred_check_branch
      %51 = sbr.rel (0) target = $region21
    $region20: #{ac_header_forward.1} parent=1 // pred_region
      _
    $region21: #{ac_header_forward.1} parent=1 // pred_fallthru
      _
    // Predicated region
    $region22: #{ac_header_forward.1} parent=1 // pred_check
      _
    $region23: #{ac_header_forward.1} parent=1 // pred_check_branch
      %53 = sbr.rel (0) target = $region25
    $region24: #{ac_header_forward.1} parent=1 // pred_region
      %54 = dma.done [#allocation3], 2048
    $region25: #{ac_header_forward.1} parent=1 // pred_fallthru
      _
    // Predicated region
    $region26: #{ac_header_forward.1} parent=1 // pred_check
      _
    $region27: #{ac_header_forward.1} parent=1 // pred_check_branch
      %56 = sbr.rel (0) target = $region29
    $region28: #{ac_header_forward.1} parent=1 // pred_region
      %57 = dma.done [#allocation5], 2048
    $region29: #{ac_header_forward.1} parent=1 // pred_fallthru
      _
    // Predicated region
    $region30: #{ac_header_forward.1} parent=1 // pred_check
      _
    $region31: #{ac_header_forward.1} parent=1 // pred_check_branch
      %59 = sbr.rel (0) target = $region33
    $region32: #{ac_header_forward.1} parent=1 // pred_region
      %60 = dma.done [#allocation5], 8192
    $region33: #{ac_header_forward.1} parent=1 // pred_fallthru
      _
    %v62 = vld [vmem:[#allocation2] sm:$0xff]
    %v63 = vld [vmem:[#allocation2 + $0x8] sm:$0xff]
    %v64 = vld [vmem:[#allocation2 + $0x10] sm:$0xff]
    %v65 = vld [vmem:[#allocation2 + $0x18] sm:$0xff]
    %v66 = vld [vmem:[#allocation2 + $0x20] sm:$0xff]
    %v67 = vld [vmem:[#allocation2 + $0x28] sm:$0xff]
    %v68 = vld [vmem:[#allocation2 + $0x30] sm:$0xff]
    %v69 = vld [vmem:[#allocation2 + $0x38] sm:$0xff]
    %v70 = vld [vmem:[#allocation2 + $0x40] sm:$0xff]
    %v71 = vld [vmem:[#allocation2 + $0x48] sm:$0xff]
    %v72 = vld [vmem:[#allocation2 + $0x50] sm:$0xff]
    %v73 = vld [vmem:[#allocation2 + $0x58] sm:$0xff]
    %v74 = vld [vmem:[#allocation2 + $0x60] sm:$0xff]
    %v75 = vld [vmem:[#allocation2 + $0x68] sm:$0xff]
    %v76 = vld [vmem:[#allocation2 + $0x70] sm:$0xff]
    %v77 = vld [vmem:[#allocation2 + $0x78] sm:$0xff]
    %v78 = vpack.c.bf16 %v63, %v62
    %v79 = vpack.c.bf16 %v65, %v64
    %v80 = vpack.c.bf16 %v67, %v66
    %v81 = vpack.c.bf16 %v69, %v68
    %v82 = vpack.c.bf16 %v71, %v70
    %v83 = vpack.c.bf16 %v73, %v72
    %v84 = vpack.c.bf16 %v75, %v74
    %v85 = vpack.c.bf16 %v77, %v76
    %v86 = vld [vmem:[#allocation4] sm:$0xff]
    %v87 = vld [vmem:[#allocation4 + $0x8] sm:$0xff]
    %v88 = vld [vmem:[#allocation4 + $0x10] sm:$0xff]
    %v89 = vld [vmem:[#allocation4 + $0x18] sm:$0xff]
    %v90 = vld [vmem:[#allocation4 + $0x20] sm:$0xff]
    %v91 = vld [vmem:[#allocation4 + $0x28] sm:$0xff]
    %v92 = vld [vmem:[#allocation4 + $0x30] sm:$0xff]
    %v93 = vld [vmem:[#allocation4 + $0x38] sm:$0xff]
    %v94 = vld [vmem:[#allocation4 + $0x40] sm:$0xff]
    %v95 = vld [vmem:[#allocation4 + $0x48] sm:$0xff]
    %v96 = vld [vmem:[#allocation4 + $0x50] sm:$0xff]
    %v97 = vld [vmem:[#allocation4 + $0x58] sm:$0xff]
    %v98 = vld [vmem:[#allocation4 + $0x60] sm:$0xff]
    %v99 = vld [vmem:[#allocation4 + $0x68] sm:$0xff]
    %v100 = vld [vmem:[#allocation4 + $0x70] sm:$0xff]
    %v101 = vld [vmem:[#allocation4 + $0x78] sm:$0xff]
    %v102 = vld [vmem:[%s2] sm:$0xff]
    %v104 = vlaneseq
    %v105 = vshrl.u32 %v104, 7
    %v106 = vsub.s32 0, %v105
    %v107 = vrot.slane %v102, %v106
    %v108 = vlaneseq
    %v109 = vshrl.u32 %v108, 7
    %v110 = vsub.s32 1, %v109
    %v111 = vrot.slane %v102, %v110
    %v112 = vlaneseq
    %v113 = vshrl.u32 %v112, 7
    %v114 = vsub.s32 2, %v113
    %v115 = vrot.slane %v102, %v114
    %v116 = vlaneseq
    %v117 = vshrl.u32 %v116, 7
    %v118 = vsub.s32 3, %v117
    %v119 = vrot.slane %v102, %v118
    %v120 = vlaneseq
    %v121 = vshrl.u32 %v120, 7
    %v122 = vsub.s32 4, %v121
    %v123 = vrot.slane %v102, %v122
    %v124 = vlaneseq
    %v125 = vshrl.u32 %v124, 7
    %v126 = vsub.s32 5, %v125
    %v127 = vrot.slane %v102, %v126
    %v128 = vlaneseq
    %v129 = vshrl.u32 %v128, 7
    %v130 = vsub.s32 6, %v129
    %v131 = vrot.slane %v102, %v130
    %v132 = vlaneseq
    %v133 = vshrl.u32 %v132, 7
    %v134 = vsub.s32 7, %v133
    %v135 = vrot.slane %v102, %v134
    %v160 = vunpack.c.l.b16 %v86
    %v161 = vunpack.c.h.b16 %v86
    %v162 = vunpack.c.l.b16 %v87
    %v163 = vunpack.c.h.b16 %v87
    %v164 = vunpack.c.l.b16 %v88
    %v165 = vunpack.c.h.b16 %v88
    %v166 = vunpack.c.l.b16 %v89
    %v167 = vunpack.c.h.b16 %v89
    %v168 = vunpack.c.l.b16 %v90
    %v169 = vunpack.c.h.b16 %v90
    %v170 = vunpack.c.l.b16 %v91
    %v171 = vunpack.c.h.b16 %v91
    %v172 = vunpack.c.l.b16 %v92
    %v173 = vunpack.c.h.b16 %v92
    %v174 = vunpack.c.l.b16 %v93
    %v175 = vunpack.c.h.b16 %v93
    %v176 = vunpack.c.l.b16 %v94
    %v177 = vunpack.c.h.b16 %v94
    %v178 = vunpack.c.l.b16 %v95
    %v179 = vunpack.c.h.b16 %v95
    %v180 = vunpack.c.l.b16 %v96
    %v181 = vunpack.c.h.b16 %v96
    %v182 = vunpack.c.l.b16 %v97
    %v183 = vunpack.c.h.b16 %v97
    %v184 = vunpack.c.l.b16 %v98
    %v185 = vunpack.c.h.b16 %v98
    %v186 = vunpack.c.l.b16 %v99
    %v187 = vunpack.c.h.b16 %v99
    %v188 = vunpack.c.l.b16 %v100
    %v189 = vunpack.c.h.b16 %v100
    %v190 = vunpack.c.l.b16 %v101
    %v191 = vunpack.c.h.b16 %v101
    %v192 = vpack.c.b16 %v168, %v160
    %v193 = vpack.c.b16 %v169, %v161
    %v194 = vpack.c.b16 %v170, %v162
    %v195 = vpack.c.b16 %v171, %v163
    %v196 = vpack.c.b16 %v172, %v164
    %v197 = vpack.c.b16 %v173, %v165
    %v198 = vpack.c.b16 %v174, %v166
    %v199 = vpack.c.b16 %v175, %v167
    %v200 = vpack.c.b16 %v184, %v176
    %v201 = vpack.c.b16 %v185, %v177
    %v202 = vpack.c.b16 %v186, %v178
    %v203 = vpack.c.b16 %v187, %v179
    %v204 = vpack.c.b16 %v188, %v180
    %v205 = vpack.c.b16 %v189, %v181
    %v206 = vpack.c.b16 %v190, %v182
    %v207 = vpack.c.b16 %v191, %v183
    %vm224 = vcmask 261120
    %v226 = vsel %vm224, %v78, 0
    %v229 = vsel %vm224, %v79, 0
    %v232 = vsel %vm224, %v80, 0
    %v235 = vsel %vm224, %v81, 0
    %v238 = vsel %vm224, %v82, 0
    %v241 = vsel %vm224, %v83, 0
    %v244 = vsel %vm224, %v84, 0
    %v247 = vsel %vm224, %v85, 0
    %249 = vmatprep.subr.bf16.mxu0 %v193
    %250 = vmatpush1.bf16.msra.mxu0 %v192
    %251 = vmatprep.subr.bf16.mxu0 %v201
    %252 = vmatpush1.bf16.msra.mxu0 %v200
    %253 = vmatprep.subr.bf16.mxu0 0
    %254 = vmatpush1.bf16.msra.mxu0 0
    %255 = vmatprep.subr.bf16.mxu0 0
    %256 = vmatpush1.bf16.msra.mxu0 0
    %257 = vmatprep.subr.bf16.mxu0 0
    %258 = vmatpush1.bf16.msra.mxu0 0
    %259 = vmatprep.subr.bf16.mxu0 0
    %260 = vmatpush1.bf16.msra.mxu0 0
    %261 = vmatprep.subr.bf16.mxu0 0
    %262 = vmatpush1.bf16.msra.mxu0 0
    %263 = vmatprep.subr.bf16.mxu0 0
    %264 = vmatpush1.bf16.msra.mxu0 0
    %265 = vmatprep.subr.bf16.mxu0 0
    %266 = vmatpush1.bf16.msra.mxu0 0
    %267 = vmatprep.subr.bf16.mxu0 0
    %268 = vmatpush1.bf16.msra.mxu0 0
    %269 = vmatprep.subr.bf16.mxu0 0
    %270 = vmatpush1.bf16.msra.mxu0 0
    %271 = vmatprep.subr.bf16.mxu0 0
    %272 = vmatpush1.bf16.msra.mxu0 0
    %273 = vmatprep.subr.bf16.mxu0 0
    %274 = vmatpush1.bf16.msra.mxu0 0
    %275 = vmatprep.subr.bf16.mxu0 0
    %276 = vmatpush1.bf16.msra.mxu0 0
    %277 = vmatprep.subr.bf16.mxu0 0
    %278 = vmatpush1.bf16.msra.mxu0 0
    %279 = vmatprep.subr.bf16.mxu0 0
    %280 = vmatpush1.bf16.msra.mxu0 0
    %281 = vmatprep.mubr.bf16.mxu0 0
    %282 = vmatmul.mubr.bf16.gmra.mrb[0].mxu0 %v226
    %v283 = vpop.f32.mrb[0].mxu0
    %v284 = vadd.f32 %v107, %v283
    %v285 = vpop.f32.mrb[0].mxu0
    %v286 = vadd.f32 %v111, %v285
    %v287 = vpop.f32.mrb[0].mxu0
    %v288 = vadd.f32 %v107, %v287
    %v289 = vpop.f32.mrb[0].mxu0
    %v290 = vadd.f32 %v111, %v289
    %291 = vmatprep.mubr.bf16.mxu0 0
    %292 = vmatmul.mubr.bf16.gmra.mrb[0].mxu0 %v229
    %v293 = vpop.f32.mrb[0].mxu0
    %v294 = vadd.f32 %v107, %v293
    %v295 = vpop.f32.mrb[0].mxu0
    %v296 = vadd.f32 %v111, %v295
    %v297 = vpop.f32.mrb[0].mxu0
    %v298 = vadd.f32 %v107, %v297
    %v299 = vpop.f32.mrb[0].mxu0
    %v300 = vadd.f32 %v111, %v299
    %301 = vmatprep.mubr.bf16.mxu0 0
    %302 = vmatmul.mubr.bf16.gmra.mrb[0].mxu0 %v232
    %v303 = vpop.f32.mrb[0].mxu0
    %v304 = vadd.f32 %v107, %v303
    %v305 = vpop.f32.mrb[0].mxu0
    %v306 = vadd.f32 %v111, %v305
    %v307 = vpop.f32.mrb[0].mxu0
    %v308 = vadd.f32 %v107, %v307
    %v309 = vpop.f32.mrb[0].mxu0
    %v310 = vadd.f32 %v111, %v309
    %311 = vmatprep.mubr.bf16.mxu0 0
    %312 = vmatmul.mubr.bf16.gmra.mrb[0].mxu0 %v235
    %v313 = vpop.f32.mrb[0].mxu0
    %v314 = vadd.f32 %v107, %v313
    %v315 = vpop.f32.mrb[0].mxu0
    %v316 = vadd.f32 %v111, %v315
    %v317 = vpop.f32.mrb[0].mxu0
    %v318 = vadd.f32 %v107, %v317
    %v319 = vpop.f32.mrb[0].mxu0
    %v320 = vadd.f32 %v111, %v319
    %321 = vmatprep.mubr.bf16.mxu0 0
    %322 = vmatmul.mubr.bf16.gmra.mrb[0].mxu0 %v238
    %v323 = vpop.f32.mrb[0].mxu0
    %v324 = vadd.f32 %v107, %v323
    %v325 = vpop.f32.mrb[0].mxu0
    %v326 = vadd.f32 %v111, %v325
    %v327 = vpop.f32.mrb[0].mxu0
    %v328 = vadd.f32 %v107, %v327
    %v329 = vpop.f32.mrb[0].mxu0
    %v330 = vadd.f32 %v111, %v329
    %331 = vmatprep.mubr.bf16.mxu0 0
    %332 = vmatmul.mubr.bf16.gmra.mrb[0].mxu0 %v241
    %v333 = vpop.f32.mrb[0].mxu0
    %v334 = vadd.f32 %v107, %v333
    %v335 = vpop.f32.mrb[0].mxu0
    %v336 = vadd.f32 %v111, %v335
    %v337 = vpop.f32.mrb[0].mxu0
    %v338 = vadd.f32 %v107, %v337
    %v339 = vpop.f32.mrb[0].mxu0
    %v340 = vadd.f32 %v111, %v339
    %341 = vmatprep.mubr.bf16.mxu0 0
    %342 = vmatmul.mubr.bf16.gmra.mrb[0].mxu0 %v244
    %v343 = vpop.f32.mrb[0].mxu0
    %v344 = vadd.f32 %v107, %v343
    %v345 = vpop.f32.mrb[0].mxu0
    %v346 = vadd.f32 %v111, %v345
    %v347 = vpop.f32.mrb[0].mxu0
    %v348 = vadd.f32 %v107, %v347
    %v349 = vpop.f32.mrb[0].mxu0
    %v350 = vadd.f32 %v111, %v349
    %351 = vmatprep.mubr.bf16.mxu0 0
    %352 = vmatmul.mubr.bf16.gmra.mrb[0].mxu0 %v247
    %v353 = vpop.f32.mrb[0].mxu0
    %v354 = vadd.f32 %v107, %v353
    %v355 = vpop.f32.mrb[0].mxu0
    %v356 = vadd.f32 %v111, %v355
    %v357 = vpop.f32.mrb[0].mxu0
    %v358 = vadd.f32 %v107, %v357
    %v359 = vpop.f32.mrb[0].mxu0
    %v360 = vadd.f32 %v111, %v359
    %361 = vdwg.mxu0
    %362 = vmatprep.subr.bf16.mxu0 %v195
    %363 = vmatpush1.bf16.msra.mxu0 %v194
    %364 = vmatprep.subr.bf16.mxu0 %v203
    %365 = vmatpush1.bf16.msra.mxu0 %v202
    %366 = vmatprep.subr.bf16.mxu0 0
    %367 = vmatpush1.bf16.msra.mxu0 0
    %368 = vmatprep.subr.bf16.mxu0 0
    %369 = vmatpush1.bf16.msra.mxu0 0
    %370 = vmatprep.subr.bf16.mxu0 0
    %371 = vmatpush1.bf16.msra.mxu0 0
    %372 = vmatprep.subr.bf16.mxu0 0
    %373 = vmatpush1.bf16.msra.mxu0 0
    %374 = vmatprep.subr.bf16.mxu0 0
    %375 = vmatpush1.bf16.msra.mxu0 0
    %376 = vmatprep.subr.bf16.mxu0 0
    %377 = vmatpush1.bf16.msra.mxu0 0
    %378 = vmatprep.subr.bf16.mxu0 0
    %379 = vmatpush1.bf16.msra.mxu0 0
    %380 = vmatprep.subr.bf16.mxu0 0
    %381 = vmatpush1.bf16.msra.mxu0 0
    %382 = vmatprep.subr.bf16.mxu0 0
    %383 = vmatpush1.bf16.msra.mxu0 0
    %384 = vmatprep.subr.bf16.mxu0 0
    %385 = vmatpush1.bf16.msra.mxu0 0
    %386 = vmatprep.subr.bf16.mxu0 0
    %387 = vmatpush1.bf16.msra.mxu0 0
    %388 = vmatprep.subr.bf16.mxu0 0
    %389 = vmatpush1.bf16.msra.mxu0 0
    %390 = vmatprep.subr.bf16.mxu0 0
    %391 = vmatpush1.bf16.msra.mxu0 0
    %392 = vmatprep.subr.bf16.mxu0 0
    %393 = vmatpush1.bf16.msra.mxu0 0
    %394 = vmatprep.mubr.bf16.mxu0 0
    %395 = vmatmul.mubr.bf16.gmra.mrb[0].mxu0 %v226
    %v396 = vpop.f32.mrb[0].mxu0
    %v397 = vadd.f32 %v115, %v396
    %v398 = vpop.f32.mrb[0].mxu0
    %v399 = vadd.f32 %v119, %v398
    %v400 = vpop.f32.mrb[0].mxu0
    %v401 = vadd.f32 %v115, %v400
    %v402 = vpop.f32.mrb[0].mxu0
    %v403 = vadd.f32 %v119, %v402
    %404 = vmatprep.mubr.bf16.mxu0 0
    %405 = vmatmul.mubr.bf16.gmra.mrb[0].mxu0 %v229
    %v406 = vpop.f32.mrb[0].mxu0
    %v407 = vadd.f32 %v115, %v406
    %v408 = vpop.f32.mrb[0].mxu0
    %v409 = vadd.f32 %v119, %v408
    %v410 = vpop.f32.mrb[0].mxu0
    %v411 = vadd.f32 %v115, %v410
    %v412 = vpop.f32.mrb[0].mxu0
    %v413 = vadd.f32 %v119, %v412
    %414 = vmatprep.mubr.bf16.mxu0 0
    %415 = vmatmul.mubr.bf16.gmra.mrb[0].mxu0 %v232
    %v416 = vpop.f32.mrb[0].mxu0
    %v417 = vadd.f32 %v115, %v416
    %v418 = vpop.f32.mrb[0].mxu0
    %v419 = vadd.f32 %v119, %v418
    %v420 = vpop.f32.mrb[0].mxu0
    %v421 = vadd.f32 %v115, %v420
    %v422 = vpop.f32.mrb[0].mxu0
    %v423 = vadd.f32 %v119, %v422
    %424 = vmatprep.mubr.bf16.mxu0 0
    %425 = vmatmul.mubr.bf16.gmra.mrb[0].mxu0 %v235
    %v426 = vpop.f32.mrb[0].mxu0
    %v427 = vadd.f32 %v115, %v426
    %v428 = vpop.f32.mrb[0].mxu0
    %v429 = vadd.f32 %v119, %v428
    %v430 = vpop.f32.mrb[0].mxu0
    %v431 = vadd.f32 %v115, %v430
    %v432 = vpop.f32.mrb[0].mxu0
    %v433 = vadd.f32 %v119, %v432
    %434 = vmatprep.mubr.bf16.mxu0 0
    %435 = vmatmul.mubr.bf16.gmra.mrb[0].mxu0 %v238
    %v436 = vpop.f32.mrb[0].mxu0
    %v437 = vadd.f32 %v115, %v436
    %v438 = vpop.f32.mrb[0].mxu0
    %v439 = vadd.f32 %v119, %v438
    %v440 = vpop.f32.mrb[0].mxu0
    %v441 = vadd.f32 %v115, %v440
    %v442 = vpop.f32.mrb[0].mxu0
    %v443 = vadd.f32 %v119, %v442
    %444 = vmatprep.mubr.bf16.mxu0 0
    %445 = vmatmul.mubr.bf16.gmra.mrb[0].mxu0 %v241
    %v446 = vpop.f32.mrb[0].mxu0
    %v447 = vadd.f32 %v115, %v446
    %v448 = vpop.f32.mrb[0].mxu0
    %v449 = vadd.f32 %v119, %v448
    %v450 = vpop.f32.mrb[0].mxu0
    %v451 = vadd.f32 %v115, %v450
    %v452 = vpop.f32.mrb[0].mxu0
    %v453 = vadd.f32 %v119, %v452
    %454 = vmatprep.mubr.bf16.mxu0 0
    %455 = vmatmul.mubr.bf16.gmra.mrb[0].mxu0 %v244
    %v456 = vpop.f32.mrb[0].mxu0
    %v457 = vadd.f32 %v115, %v456
    %v458 = vpop.f32.mrb[0].mxu0
    %v459 = vadd.f32 %v119, %v458
    %v460 = vpop.f32.mrb[0].mxu0
    %v461 = vadd.f32 %v115, %v460
    %v462 = vpop.f32.mrb[0].mxu0
    %v463 = vadd.f32 %v119, %v462
    %464 = vmatprep.mubr.bf16.mxu0 0
    %465 = vmatmul.mubr.bf16.gmra.mrb[0].mxu0 %v247
    %v466 = vpop.f32.mrb[0].mxu0
    %v467 = vadd.f32 %v115, %v466
    %v468 = vpop.f32.mrb[0].mxu0
    %v469 = vadd.f32 %v119, %v468
    %v470 = vpop.f32.mrb[0].mxu0
    %v471 = vadd.f32 %v115, %v470
    %v472 = vpop.f32.mrb[0].mxu0
    %v473 = vadd.f32 %v119, %v472
    %474 = vdwg.mxu0
    %475 = vmatprep.subr.bf16.mxu0 %v197
    %476 = vmatpush1.bf16.msra.mxu0 %v196
    %477 = vmatprep.subr.bf16.mxu0 %v205
    %478 = vmatpush1.bf16.msra.mxu0 %v204
    %479 = vmatprep.subr.bf16.mxu0 0
    %480 = vmatpush1.bf16.msra.mxu0 0
    %481 = vmatprep.subr.bf16.mxu0 0
    %482 = vmatpush1.bf16.msra.mxu0 0
    %483 = vmatprep.subr.bf16.mxu0 0
    %484 = vmatpush1.bf16.msra.mxu0 0
    %485 = vmatprep.subr.bf16.mxu0 0
    %486 = vmatpush1.bf16.msra.mxu0 0
    %487 = vmatprep.subr.bf16.mxu0 0
    %488 = vmatpush1.bf16.msra.mxu0 0
    %489 = vmatprep.subr.bf16.mxu0 0
    %490 = vmatpush1.bf16.msra.mxu0 0
    %491 = vmatprep.subr.bf16.mxu0 0
    %492 = vmatpush1.bf16.msra.mxu0 0
    %493 = vmatprep.subr.bf16.mxu0 0
    %494 = vmatpush1.bf16.msra.mxu0 0
    %495 = vmatprep.subr.bf16.mxu0 0
    %496 = vmatpush1.bf16.msra.mxu0 0
    %497 = vmatprep.subr.bf16.mxu0 0
    %498 = vmatpush1.bf16.msra.mxu0 0
    %499 = vmatprep.subr.bf16.mxu0 0
    %500 = vmatpush1.bf16.msra.mxu0 0
    %501 = vmatprep.subr.bf16.mxu0 0
    %502 = vmatpush1.bf16.msra.mxu0 0
    %503 = vmatprep.subr.bf16.mxu0 0
    %504 = vmatpush1.bf16.msra.mxu0 0
    %505 = vmatprep.subr.bf16.mxu0 0
    %506 = vmatpush1.bf16.msra.mxu0 0
    %507 = vmatprep.mubr.bf16.mxu0 0
    %508 = vmatmul.mubr.bf16.gmra.mrb[0].mxu0 %v226
    %v509 = vpop.f32.mrb[0].mxu0
    %v510 = vadd.f32 %v123, %v509
    %v511 = vpop.f32.mrb[0].mxu0
    %v512 = vadd.f32 %v127, %v511
    %v513 = vpop.f32.mrb[0].mxu0
    %v514 = vadd.f32 %v123, %v513
    %v515 = vpop.f32.mrb[0].mxu0
    %v516 = vadd.f32 %v127, %v515
    %517 = vmatprep.mubr.bf16.mxu0 0
    %518 = vmatmul.mubr.bf16.gmra.mrb[0].mxu0 %v229
    %v519 = vpop.f32.mrb[0].mxu0
    %v520 = vadd.f32 %v123, %v519
    %v521 = vpop.f32.mrb[0].mxu0
    %v522 = vadd.f32 %v127, %v521
    %v523 = vpop.f32.mrb[0].mxu0
    %v524 = vadd.f32 %v123, %v523
    %v525 = vpop.f32.mrb[0].mxu0
    %v526 = vadd.f32 %v127, %v525
    %527 = vmatprep.mubr.bf16.mxu0 0
    %528 = vmatmul.mubr.bf16.gmra.mrb[0].mxu0 %v232
    %v529 = vpop.f32.mrb[0].mxu0
    %v530 = vadd.f32 %v123, %v529
    %v531 = vpop.f32.mrb[0].mxu0
    %v532 = vadd.f32 %v127, %v531
    %v533 = vpop.f32.mrb[0].mxu0
    %v534 = vadd.f32 %v123, %v533
    %v535 = vpop.f32.mrb[0].mxu0
    %v536 = vadd.f32 %v127, %v535
    %537 = vmatprep.mubr.bf16.mxu0 0
    %538 = vmatmul.mubr.bf16.gmra.mrb[0].mxu0 %v235
    %v539 = vpop.f32.mrb[0].mxu0
    %v540 = vadd.f32 %v123, %v539
    %v541 = vpop.f32.mrb[0].mxu0
    %v542 = vadd.f32 %v127, %v541
    %v543 = vpop.f32.mrb[0].mxu0
    %v544 = vadd.f32 %v123, %v543
    %v545 = vpop.f32.mrb[0].mxu0
    %v546 = vadd.f32 %v127, %v545
    %547 = vmatprep.mubr.bf16.mxu0 0
    %548 = vmatmul.mubr.bf16.gmra.mrb[0].mxu0 %v238
    %v549 = vpop.f32.mrb[0].mxu0
    %v550 = vadd.f32 %v123, %v549
    %v551 = vpop.f32.mrb[0].mxu0
    %v552 = vadd.f32 %v127, %v551
    %v553 = vpop.f32.mrb[0].mxu0
    %v554 = vadd.f32 %v123, %v553
    %v555 = vpop.f32.mrb[0].mxu0
    %v556 = vadd.f32 %v127, %v555
    %557 = vmatprep.mubr.bf16.mxu0 0
    %558 = vmatmul.mubr.bf16.gmra.mrb[0].mxu0 %v241
    %v559 = vpop.f32.mrb[0].mxu0
    %v560 = vadd.f32 %v123, %v559
    %v561 = vpop.f32.mrb[0].mxu0
    %v562 = vadd.f32 %v127, %v561
    %v563 = vpop.f32.mrb[0].mxu0
    %v564 = vadd.f32 %v123, %v563
    %v565 = vpop.f32.mrb[0].mxu0
    %v566 = vadd.f32 %v127, %v565
    %567 = vmatprep.mubr.bf16.mxu0 0
    %568 = vmatmul.mubr.bf16.gmra.mrb[0].mxu0 %v244
    %v569 = vpop.f32.mrb[0].mxu0
    %v570 = vadd.f32 %v123, %v569
    %v571 = vpop.f32.mrb[0].mxu0
    %v572 = vadd.f32 %v127, %v571
    %v573 = vpop.f32.mrb[0].mxu0
    %v574 = vadd.f32 %v123, %v573
    %v575 = vpop.f32.mrb[0].mxu0
    %v576 = vadd.f32 %v127, %v575
    %577 = vmatprep.mubr.bf16.mxu0 0
    %578 = vmatmul.mubr.bf16.gmra.mrb[0].mxu0 %v247
    %v579 = vpop.f32.mrb[0].mxu0
    %v580 = vadd.f32 %v123, %v579
    %v581 = vpop.f32.mrb[0].mxu0
    %v582 = vadd.f32 %v127, %v581
    %v583 = vpop.f32.mrb[0].mxu0
    %v584 = vadd.f32 %v123, %v583
    %v585 = vpop.f32.mrb[0].mxu0
    %v586 = vadd.f32 %v127, %v585
    %587 = vdwg.mxu0
    %588 = vmatprep.subr.bf16.mxu0 %v199
    %589 = vmatpush1.bf16.msra.mxu0 %v198
    %590 = vmatprep.subr.bf16.mxu0 %v207
    %591 = vmatpush1.bf16.msra.mxu0 %v206
    %592 = vmatprep.subr.bf16.mxu0 0
    %593 = vmatpush1.bf16.msra.mxu0 0
    %594 = vmatprep.subr.bf16.mxu0 0
    %595 = vmatpush1.bf16.msra.mxu0 0
    %596 = vmatprep.subr.bf16.mxu0 0
    %597 = vmatpush1.bf16.msra.mxu0 0
    %598 = vmatprep.subr.bf16.mxu0 0
    %599 = vmatpush1.bf16.msra.mxu0 0
    %600 = vmatprep.subr.bf16.mxu0 0
    %601 = vmatpush1.bf16.msra.mxu0 0
    %602 = vmatprep.subr.bf16.mxu0 0
    %603 = vmatpush1.bf16.msra.mxu0 0
    %604 = vmatprep.subr.bf16.mxu0 0
    %605 = vmatpush1.bf16.msra.mxu0 0
    %606 = vmatprep.subr.bf16.mxu0 0
    %607 = vmatpush1.bf16.msra.mxu0 0
    %608 = vmatprep.subr.bf16.mxu0 0
    %609 = vmatpush1.bf16.msra.mxu0 0
    %610 = vmatprep.subr.bf16.mxu0 0
    %611 = vmatpush1.bf16.msra.mxu0 0
    %612 = vmatprep.subr.bf16.mxu0 0
    %613 = vmatpush1.bf16.msra.mxu0 0
    %614 = vmatprep.subr.bf16.mxu0 0
    %615 = vmatpush1.bf16.msra.mxu0 0
    %616 = vmatprep.subr.bf16.mxu0 0
    %617 = vmatpush1.bf16.msra.mxu0 0
    %618 = vmatprep.subr.bf16.mxu0 0
    %619 = vmatpush1.bf16.msra.mxu0 0
    %620 = vmatprep.mubr.bf16.mxu0 0
    %621 = vmatmul.mubr.bf16.gmra.mrb[0].mxu0 %v226
    %v622 = vpop.f32.mrb[0].mxu0
    %v623 = vadd.f32 %v131, %v622
    %v624 = vpop.f32.mrb[0].mxu0
    %v625 = vadd.f32 %v135, %v624
    %v626 = vpop.f32.mrb[0].mxu0
    %v627 = vadd.f32 %v131, %v626
    %v628 = vpop.f32.mrb[0].mxu0
    %v629 = vadd.f32 %v135, %v628
    %630 = vmatprep.mubr.bf16.mxu0 0
    %631 = vmatmul.mubr.bf16.gmra.mrb[0].mxu0 %v229
    %v632 = vpop.f32.mrb[0].mxu0
    %v633 = vadd.f32 %v131, %v632
    %v634 = vpop.f32.mrb[0].mxu0
    %v635 = vadd.f32 %v135, %v634
    %v636 = vpop.f32.mrb[0].mxu0
    %v637 = vadd.f32 %v131, %v636
    %v638 = vpop.f32.mrb[0].mxu0
    %v639 = vadd.f32 %v135, %v638
    %640 = vmatprep.mubr.bf16.mxu0 0
    %641 = vmatmul.mubr.bf16.gmra.mrb[0].mxu0 %v232
    %v642 = vpop.f32.mrb[0].mxu0
    %v643 = vadd.f32 %v131, %v642
    %v644 = vpop.f32.mrb[0].mxu0
    %v645 = vadd.f32 %v135, %v644
    %v646 = vpop.f32.mrb[0].mxu0
    %v647 = vadd.f32 %v131, %v646
    %v648 = vpop.f32.mrb[0].mxu0
    %v649 = vadd.f32 %v135, %v648
    %650 = vmatprep.mubr.bf16.mxu0 0
    %651 = vmatmul.mubr.bf16.gmra.mrb[0].mxu0 %v235
    %v652 = vpop.f32.mrb[0].mxu0
    %v653 = vadd.f32 %v131, %v652
    %v654 = vpop.f32.mrb[0].mxu0
    %v655 = vadd.f32 %v135, %v654
    %v656 = vpop.f32.mrb[0].mxu0
    %v657 = vadd.f32 %v131, %v656
    %v658 = vpop.f32.mrb[0].mxu0
    %v659 = vadd.f32 %v135, %v658
    %660 = vmatprep.mubr.bf16.mxu0 0
    %661 = vmatmul.mubr.bf16.gmra.mrb[0].mxu0 %v238
    %v662 = vpop.f32.mrb[0].mxu0
    %v663 = vadd.f32 %v131, %v662
    %v664 = vpop.f32.mrb[0].mxu0
    %v665 = vadd.f32 %v135, %v664
    %v666 = vpop.f32.mrb[0].mxu0
    %v667 = vadd.f32 %v131, %v666
    %v668 = vpop.f32.mrb[0].mxu0
    %v669 = vadd.f32 %v135, %v668
    %670 = vmatprep.mubr.bf16.mxu0 0
    %671 = vmatmul.mubr.bf16.gmra.mrb[0].mxu0 %v241
    %v672 = vpop.f32.mrb[0].mxu0
    %v673 = vadd.f32 %v131, %v672
    %v674 = vpop.f32.mrb[0].mxu0
    %v675 = vadd.f32 %v135, %v674
    %v676 = vpop.f32.mrb[0].mxu0
    %v677 = vadd.f32 %v131, %v676
    %v678 = vpop.f32.mrb[0].mxu0
    %v679 = vadd.f32 %v135, %v678
    %680 = vmatprep.mubr.bf16.mxu0 0
    %681 = vmatmul.mubr.bf16.gmra.mrb[0].mxu0 %v244
    %v682 = vpop.f32.mrb[0].mxu0
    %v683 = vadd.f32 %v131, %v682
    %v684 = vpop.f32.mrb[0].mxu0
    %v685 = vadd.f32 %v135, %v684
    %v686 = vpop.f32.mrb[0].mxu0
    %v687 = vadd.f32 %v131, %v686
    %v688 = vpop.f32.mrb[0].mxu0
    %v689 = vadd.f32 %v135, %v688
    %690 = vmatprep.mubr.bf16.mxu0 0
    %691 = vmatmul.mubr.bf16.gmra.mrb[0].mxu0 %v247
    %v692 = vpop.f32.mrb[0].mxu0
    %v693 = vadd.f32 %v131, %v692
    %v694 = vpop.f32.mrb[0].mxu0
    %v695 = vadd.f32 %v135, %v694
    %v696 = vpop.f32.mrb[0].mxu0
    %v697 = vadd.f32 %v131, %v696
    %v698 = vpop.f32.mrb[0].mxu0
    %v699 = vadd.f32 %v135, %v698
    %700 = vdwg.mxu0
    %v701 = vpack.c.bf16 %v288, %v284
    %v702 = vpack.c.bf16 %v290, %v286
    %v703 = vpack.c.bf16 %v401, %v397
    %v704 = vpack.c.bf16 %v403, %v399
    %v705 = vpack.c.bf16 %v514, %v510
    %v706 = vpack.c.bf16 %v516, %v512
    %v707 = vpack.c.bf16 %v627, %v623
    %v708 = vpack.c.bf16 %v629, %v625
    %v709 = vpack.c.bf16 %v298, %v294
    %v710 = vpack.c.bf16 %v300, %v296
    %v711 = vpack.c.bf16 %v411, %v407
    %v712 = vpack.c.bf16 %v413, %v409
    %v713 = vpack.c.bf16 %v524, %v520
    %v714 = vpack.c.bf16 %v526, %v522
    %v715 = vpack.c.bf16 %v637, %v633
    %v716 = vpack.c.bf16 %v639, %v635
    %v717 = vpack.c.bf16 %v308, %v304
    %v718 = vpack.c.bf16 %v310, %v306
    %v719 = vpack.c.bf16 %v421, %v417
    %v720 = vpack.c.bf16 %v423, %v419
    %v721 = vpack.c.bf16 %v534, %v530
    %v722 = vpack.c.bf16 %v536, %v532
    %v723 = vpack.c.bf16 %v647, %v643
    %v724 = vpack.c.bf16 %v649, %v645
    %v725 = vpack.c.bf16 %v318, %v314
    %v726 = vpack.c.bf16 %v320, %v316
    %v727 = vpack.c.bf16 %v431, %v427
    %v728 = vpack.c.bf16 %v433, %v429
    %v729 = vpack.c.bf16 %v544, %v540
    %v730 = vpack.c.bf16 %v546, %v542
    %v731 = vpack.c.bf16 %v657, %v653
    %v732 = vpack.c.bf16 %v659, %v655
    %v733 = vpack.c.bf16 %v328, %v324
    %v734 = vpack.c.bf16 %v330, %v326
    %v735 = vpack.c.bf16 %v441, %v437
    %v736 = vpack.c.bf16 %v443, %v439
    %v737 = vpack.c.bf16 %v554, %v550
    %v738 = vpack.c.bf16 %v556, %v552
    %v739 = vpack.c.bf16 %v667, %v663
    %v740 = vpack.c.bf16 %v669, %v665
    %v741 = vpack.c.bf16 %v338, %v334
    %v742 = vpack.c.bf16 %v340, %v336
    %v743 = vpack.c.bf16 %v451, %v447
    %v744 = vpack.c.bf16 %v453, %v449
    %v745 = vpack.c.bf16 %v564, %v560
    %v746 = vpack.c.bf16 %v566, %v562
    %v747 = vpack.c.bf16 %v677, %v673
    %v748 = vpack.c.bf16 %v679, %v675
    %v749 = vpack.c.bf16 %v348, %v344
    %v750 = vpack.c.bf16 %v350, %v346
    %v751 = vpack.c.bf16 %v461, %v457
    %v752 = vpack.c.bf16 %v463, %v459
    %v753 = vpack.c.bf16 %v574, %v570
    %v754 = vpack.c.bf16 %v576, %v572
    %v755 = vpack.c.bf16 %v687, %v683
    %v756 = vpack.c.bf16 %v689, %v685
    %v757 = vpack.c.bf16 %v358, %v354
    %v758 = vpack.c.bf16 %v360, %v356
    %v759 = vpack.c.bf16 %v471, %v467
    %v760 = vpack.c.bf16 %v473, %v469
    %v761 = vpack.c.bf16 %v584, %v580
    %v762 = vpack.c.bf16 %v586, %v582
    %v763 = vpack.c.bf16 %v697, %v693
    %v764 = vpack.c.bf16 %v699, %v695
    %v765 = vtanh.bf16.pop %v701
    %v766 = vtanh.bf16.pop %v702
    %v767 = vtanh.bf16.pop %v703
    %v768 = vtanh.bf16.pop %v704
    %v769 = vtanh.bf16.pop %v705
    %v770 = vtanh.bf16.pop %v706
    %v771 = vtanh.bf16.pop %v707
    %v772 = vtanh.bf16.pop %v708
    %v773 = vtanh.bf16.pop %v709
    %v774 = vtanh.bf16.pop %v710
    %v775 = vtanh.bf16.pop %v711
    %v776 = vtanh.bf16.pop %v712
    %v777 = vtanh.bf16.pop %v713
    %v778 = vtanh.bf16.pop %v714
    %v779 = vtanh.bf16.pop %v715
    %v780 = vtanh.bf16.pop %v716
    %v781 = vtanh.bf16.pop %v717
    %v782 = vtanh.bf16.pop %v718
    %v783 = vtanh.bf16.pop %v719
    %v784 = vtanh.bf16.pop %v720
    %v785 = vtanh.bf16.pop %v721
    %v786 = vtanh.bf16.pop %v722
    %v787 = vtanh.bf16.pop %v723
    %v788 = vtanh.bf16.pop %v724
    %v789 = vtanh.bf16.pop %v725
    %v790 = vtanh.bf16.pop %v726
    %v791 = vtanh.bf16.pop %v727
    %v792 = vtanh.bf16.pop %v728
    %v793 = vtanh.bf16.pop %v729
    %v794 = vtanh.bf16.pop %v730
    %v795 = vtanh.bf16.pop %v731
    %v796 = vtanh.bf16.pop %v732
    %v797 = vtanh.bf16.pop %v733
    %v798 = vtanh.bf16.pop %v734
    %v799 = vtanh.bf16.pop %v735
    %v800 = vtanh.bf16.pop %v736
    %v801 = vtanh.bf16.pop %v737
    %v802 = vtanh.bf16.pop %v738
    %v803 = vtanh.bf16.pop %v739
    %v804 = vtanh.bf16.pop %v740
    %v805 = vtanh.bf16.pop %v741
    %v806 = vtanh.bf16.pop %v742
    %v807 = vtanh.bf16.pop %v743
    %v808 = vtanh.bf16.pop %v744
    %v809 = vtanh.bf16.pop %v745
    %v810 = vtanh.bf16.pop %v746
    %v811 = vtanh.bf16.pop %v747
    %v812 = vtanh.bf16.pop %v748
    %v813 = vtanh.bf16.pop %v749
    %v814 = vtanh.bf16.pop %v750
    %v815 = vtanh.bf16.pop %v751
    %v816 = vtanh.bf16.pop %v752
    %v817 = vtanh.bf16.pop %v753
    %v818 = vtanh.bf16.pop %v754
    %v819 = vtanh.bf16.pop %v755
    %v820 = vtanh.bf16.pop %v756
    %v821 = vtanh.bf16.pop %v757
    %v822 = vtanh.bf16.pop %v758
    %v823 = vtanh.bf16.pop %v759
    %v824 = vtanh.bf16.pop %v760
    %v825 = vtanh.bf16.pop %v761
    %v826 = vtanh.bf16.pop %v762
    %v827 = vtanh.bf16.pop %v763
    %v828 = vtanh.bf16.pop %v764
    %v829 = vld [vmem:[#allocation6] sm:$0xf]
    %v830 = vld [vmem:[#allocation6 + $0x4] sm:$0xf]
    %v831 = vld [vmem:[#allocation6 + $0x8] sm:$0xf]
    %v832 = vld [vmem:[#allocation6 + $0xc] sm:$0xf]
    %v833 = vld [vmem:[#allocation6 + $0x10] sm:$0xf]
    %v834 = vld [vmem:[#allocation6 + $0x14] sm:$0xf]
    %v835 = vld [vmem:[#allocation6 + $0x18] sm:$0xf]
    %v836 = vld [vmem:[#allocation6 + $0x1c] sm:$0xf]
    %v837 = vld [vmem:[#allocation6 + $0x20] sm:$0xf]
    %v838 = vld [vmem:[#allocation6 + $0x24] sm:$0xf]
    %v839 = vld [vmem:[#allocation6 + $0x28] sm:$0xf]
    %v840 = vld [vmem:[#allocation6 + $0x2c] sm:$0xf]
    %v841 = vld [vmem:[#allocation6 + $0x30] sm:$0xf]
    %v842 = vld [vmem:[#allocation6 + $0x34] sm:$0xf]
    %v843 = vld [vmem:[#allocation6 + $0x38] sm:$0xf]
    %v844 = vld [vmem:[#allocation6 + $0x3c] sm:$0xf]
    %v845 = vld [vmem:[#allocation6 + $0x40] sm:$0xf]
    %v846 = vld [vmem:[#allocation6 + $0x44] sm:$0xf]
    %v847 = vld [vmem:[#allocation6 + $0x48] sm:$0xf]
    %v848 = vld [vmem:[#allocation6 + $0x4c] sm:$0xf]
    %v849 = vld [vmem:[#allocation6 + $0x50] sm:$0xf]
    %v850 = vld [vmem:[#allocation6 + $0x54] sm:$0xf]
    %v851 = vld [vmem:[#allocation6 + $0x58] sm:$0xf]
    %v852 = vld [vmem:[#allocation6 + $0x5c] sm:$0xf]
    %v853 = vld [vmem:[#allocation6 + $0x60] sm:$0xf]
    %v854 = vld [vmem:[#allocation6 + $0x64] sm:$0xf]
    %v855 = vld [vmem:[#allocation6 + $0x68] sm:$0xf]
    %v856 = vld [vmem:[#allocation6 + $0x6c] sm:$0xf]
    %v857 = vld [vmem:[#allocation6 + $0x70] sm:$0xf]
    %v858 = vld [vmem:[#allocation6 + $0x74] sm:$0xf]
    %v859 = vld [vmem:[#allocation6 + $0x78] sm:$0xf]
    %v860 = vld [vmem:[#allocation6 + $0x7c] sm:$0xf]
    %v861 = vld [vmem:[#allocation6 + $0x80] sm:$0xf]
    %v862 = vld [vmem:[#allocation6 + $0x84] sm:$0xf]
    %v863 = vld [vmem:[#allocation6 + $0x88] sm:$0xf]
    %v864 = vld [vmem:[#allocation6 + $0x8c] sm:$0xf]
    %v865 = vld [vmem:[#allocation6 + $0x90] sm:$0xf]
    %v866 = vld [vmem:[#allocation6 + $0x94] sm:$0xf]
    %v867 = vld [vmem:[#allocation6 + $0x98] sm:$0xf]
    %v868 = vld [vmem:[#allocation6 + $0x9c] sm:$0xf]
    %v869 = vld [vmem:[#allocation6 + $0xa0] sm:$0xf]
    %v870 = vld [vmem:[#allocation6 + $0xa4] sm:$0xf]
    %v871 = vld [vmem:[#allocation6 + $0xa8] sm:$0xf]
    %v872 = vld [vmem:[#allocation6 + $0xac] sm:$0xf]
    %v873 = vld [vmem:[#allocation6 + $0xb0] sm:$0xf]
    %v874 = vld [vmem:[#allocation6 + $0xb4] sm:$0xf]
    %v875 = vld [vmem:[#allocation6 + $0xb8] sm:$0xf]
    %v876 = vld [vmem:[#allocation6 + $0xbc] sm:$0xf]
    %v877 = vld [vmem:[#allocation6 + $0xc0] sm:$0xf]
    %v878 = vld [vmem:[#allocation6 + $0xc4] sm:$0xf]
    %v879 = vld [vmem:[#allocation6 + $0xc8] sm:$0xf]
    %v880 = vld [vmem:[#allocation6 + $0xcc] sm:$0xf]
    %v881 = vld [vmem:[#allocation6 + $0xd0] sm:$0xf]
    %v882 = vld [vmem:[#allocation6 + $0xd4] sm:$0xf]
    %v883 = vld [vmem:[#allocation6 + $0xd8] sm:$0xf]
    %v884 = vld [vmem:[#allocation6 + $0xdc] sm:$0xf]
    %v885 = vld [vmem:[#allocation6 + $0xe0] sm:$0xf]
    %v886 = vld [vmem:[#allocation6 + $0xe4] sm:$0xf]
    %v887 = vld [vmem:[#allocation6 + $0xe8] sm:$0xf]
    %v888 = vld [vmem:[#allocation6 + $0xec] sm:$0xf]
    %v889 = vld [vmem:[#allocation6 + $0xf0] sm:$0xf]
    %v890 = vld [vmem:[#allocation6 + $0xf4] sm:$0xf]
    %v891 = vld [vmem:[#allocation6 + $0xf8] sm:$0xf]
    %v892 = vld [vmem:[#allocation6 + $0xfc] sm:$0xf]
    %v893 = vld [vmem:[#allocation6 + $0x100] sm:$0xf]
    %v894 = vld [vmem:[#allocation6 + $0x104] sm:$0xf]
    %v895 = vld [vmem:[#allocation6 + $0x108] sm:$0xf]
    %v896 = vld [vmem:[#allocation6 + $0x10c] sm:$0xf]
    %v897 = vld [vmem:[#allocation6 + $0x110] sm:$0xf]
    %v898 = vld [vmem:[#allocation6 + $0x114] sm:$0xf]
    %v899 = vld [vmem:[#allocation6 + $0x118] sm:$0xf]
    %v900 = vld [vmem:[#allocation6 + $0x11c] sm:$0xf]
    %v901 = vld [vmem:[#allocation6 + $0x120] sm:$0xf]
    %v902 = vld [vmem:[#allocation6 + $0x124] sm:$0xf]
    %v903 = vld [vmem:[#allocation6 + $0x128] sm:$0xf]
    %v904 = vld [vmem:[#allocation6 + $0x12c] sm:$0xf]
    %v905 = vld [vmem:[#allocation6 + $0x130] sm:$0xf]
    %v906 = vld [vmem:[#allocation6 + $0x134] sm:$0xf]
    %v907 = vld [vmem:[#allocation6 + $0x138] sm:$0xf]
    %v908 = vld [vmem:[#allocation6 + $0x13c] sm:$0xf]
    %v909 = vld [vmem:[#allocation6 + $0x140] sm:$0xf]
    %v910 = vld [vmem:[#allocation6 + $0x144] sm:$0xf]
    %v911 = vld [vmem:[#allocation6 + $0x148] sm:$0xf]
    %v912 = vld [vmem:[#allocation6 + $0x14c] sm:$0xf]
    %v913 = vld [vmem:[#allocation6 + $0x150] sm:$0xf]
    %v914 = vld [vmem:[#allocation6 + $0x154] sm:$0xf]
    %v915 = vld [vmem:[#allocation6 + $0x158] sm:$0xf]
    %v916 = vld [vmem:[#allocation6 + $0x15c] sm:$0xf]
    %v917 = vld [vmem:[#allocation6 + $0x160] sm:$0xf]
    %v918 = vld [vmem:[#allocation6 + $0x164] sm:$0xf]
    %v919 = vld [vmem:[#allocation6 + $0x168] sm:$0xf]
    %v920 = vld [vmem:[#allocation6 + $0x16c] sm:$0xf]
    %v921 = vld [vmem:[#allocation6 + $0x170] sm:$0xf]
    %v922 = vld [vmem:[#allocation6 + $0x174] sm:$0xf]
    %v923 = vld [vmem:[#allocation6 + $0x178] sm:$0xf]
    %v924 = vld [vmem:[#allocation6 + $0x17c] sm:$0xf]
    %v925 = vld [vmem:[#allocation6 + $0x180] sm:$0xf]
    %v926 = vld [vmem:[#allocation6 + $0x184] sm:$0xf]
    %v927 = vld [vmem:[#allocation6 + $0x188] sm:$0xf]
    %v928 = vld [vmem:[#allocation6 + $0x18c] sm:$0xf]
    %v929 = vld [vmem:[#allocation6 + $0x190] sm:$0xf]
    %v930 = vld [vmem:[#allocation6 + $0x194] sm:$0xf]
    %v931 = vld [vmem:[#allocation6 + $0x198] sm:$0xf]
    %v932 = vld [vmem:[#allocation6 + $0x19c] sm:$0xf]
    %v933 = vld [vmem:[#allocation6 + $0x1a0] sm:$0xf]
    %v934 = vld [vmem:[#allocation6 + $0x1a4] sm:$0xf]
    %v935 = vld [vmem:[#allocation6 + $0x1a8] sm:$0xf]
    %v936 = vld [vmem:[#allocation6 + $0x1ac] sm:$0xf]
    %v937 = vld [vmem:[#allocation6 + $0x1b0] sm:$0xf]
    %v938 = vld [vmem:[#allocation6 + $0x1b4] sm:$0xf]
    %v939 = vld [vmem:[#allocation6 + $0x1b8] sm:$0xf]
    %v940 = vld [vmem:[#allocation6 + $0x1bc] sm:$0xf]
    %v941 = vld [vmem:[#allocation6 + $0x1c0] sm:$0xf]
    %v942 = vld [vmem:[#allocation6 + $0x1c4] sm:$0xf]
    %v943 = vld [vmem:[#allocation6 + $0x1c8] sm:$0xf]
    %v944 = vld [vmem:[#allocation6 + $0x1cc] sm:$0xf]
    %v945 = vld [vmem:[#allocation6 + $0x1d0] sm:$0xf]
    %v946 = vld [vmem:[#allocation6 + $0x1d4] sm:$0xf]
    %v947 = vld [vmem:[#allocation6 + $0x1d8] sm:$0xf]
    %v948 = vld [vmem:[#allocation6 + $0x1dc] sm:$0xf]
    %v949 = vld [vmem:[#allocation6 + $0x1e0] sm:$0xf]
    %v950 = vld [vmem:[#allocation6 + $0x1e4] sm:$0xf]
    %v951 = vld [vmem:[#allocation6 + $0x1e8] sm:$0xf]
    %v952 = vld [vmem:[#allocation6 + $0x1ec] sm:$0xf]
    %v953 = vld [vmem:[#allocation6 + $0x1f0] sm:$0xf]
    %v954 = vld [vmem:[#allocation6 + $0x1f4] sm:$0xf]
    %v955 = vld [vmem:[#allocation6 + $0x1f8] sm:$0xf]
    %v956 = vld [vmem:[#allocation6 + $0x1fc] sm:$0xf]
    %v957 = vld [vmem:[%s4] sm:$0x1]
    %v959 = vlaneseq
    %v960 = vshrl.u32 %v959, 7
    %v961 = vsub.s32 0, %v960
    %v962 = vrot.slane %v957, %v961
    %v1092 = vunpack.c.l.b16 %v829
    %v1093 = vunpack.c.l.b16 %v830
    %v1094 = vunpack.c.l.b16 %v831
    %v1095 = vunpack.c.l.b16 %v832
    %v1096 = vunpack.c.l.b16 %v833
    %v1097 = vunpack.c.l.b16 %v834
    %v1098 = vunpack.c.l.b16 %v835
    %v1099 = vunpack.c.l.b16 %v836
    %v1100 = vunpack.c.l.b16 %v837
    %v1101 = vunpack.c.l.b16 %v838
    %v1102 = vunpack.c.l.b16 %v839
    %v1103 = vunpack.c.l.b16 %v840
    %v1104 = vunpack.c.l.b16 %v841
    %v1105 = vunpack.c.l.b16 %v842
    %v1106 = vunpack.c.l.b16 %v843
    %v1107 = vunpack.c.l.b16 %v844
    %v1108 = vunpack.c.l.b16 %v845
    %v1109 = vunpack.c.l.b16 %v846
    %v1110 = vunpack.c.l.b16 %v847
    %v1111 = vunpack.c.l.b16 %v848
    %v1112 = vunpack.c.l.b16 %v849
    %v1113 = vunpack.c.l.b16 %v850
    %v1114 = vunpack.c.l.b16 %v851
    %v1115 = vunpack.c.l.b16 %v852
    %v1116 = vunpack.c.l.b16 %v853
    %v1117 = vunpack.c.l.b16 %v854
    %v1118 = vunpack.c.l.b16 %v855
    %v1119 = vunpack.c.l.b16 %v856
    %v1120 = vunpack.c.l.b16 %v857
    %v1121 = vunpack.c.l.b16 %v858
    %v1122 = vunpack.c.l.b16 %v859
    %v1123 = vunpack.c.l.b16 %v860
    %v1124 = vunpack.c.l.b16 %v861
    %v1125 = vunpack.c.l.b16 %v862
    %v1126 = vunpack.c.l.b16 %v863
    %v1127 = vunpack.c.l.b16 %v864
    %v1128 = vunpack.c.l.b16 %v865
    %v1129 = vunpack.c.l.b16 %v866
    %v1130 = vunpack.c.l.b16 %v867
    %v1131 = vunpack.c.l.b16 %v868
    %v1132 = vunpack.c.l.b16 %v869
    %v1133 = vunpack.c.l.b16 %v870
    %v1134 = vunpack.c.l.b16 %v871
    %v1135 = vunpack.c.l.b16 %v872
    %v1136 = vunpack.c.l.b16 %v873
    %v1137 = vunpack.c.l.b16 %v874
    %v1138 = vunpack.c.l.b16 %v875
    %v1139 = vunpack.c.l.b16 %v876
    %v1140 = vunpack.c.l.b16 %v877
    %v1141 = vunpack.c.l.b16 %v878
    %v1142 = vunpack.c.l.b16 %v879
    %v1143 = vunpack.c.l.b16 %v880
    %v1144 = vunpack.c.l.b16 %v881
    %v1145 = vunpack.c.l.b16 %v882
    %v1146 = vunpack.c.l.b16 %v883
    %v1147 = vunpack.c.l.b16 %v884
    %v1148 = vunpack.c.l.b16 %v885
    %v1149 = vunpack.c.l.b16 %v886
    %v1150 = vunpack.c.l.b16 %v887
    %v1151 = vunpack.c.l.b16 %v888
    %v1152 = vunpack.c.l.b16 %v889
    %v1153 = vunpack.c.l.b16 %v890
    %v1154 = vunpack.c.l.b16 %v891
    %v1155 = vunpack.c.l.b16 %v892
    %v1156 = vunpack.c.l.b16 %v893
    %v1157 = vunpack.c.l.b16 %v894
    %v1158 = vunpack.c.l.b16 %v895
    %v1159 = vunpack.c.l.b16 %v896
    %v1160 = vunpack.c.l.b16 %v897
    %v1161 = vunpack.c.l.b16 %v898
    %v1162 = vunpack.c.l.b16 %v899
    %v1163 = vunpack.c.l.b16 %v900
    %v1164 = vunpack.c.l.b16 %v901
    %v1165 = vunpack.c.l.b16 %v902
    %v1166 = vunpack.c.l.b16 %v903
    %v1167 = vunpack.c.l.b16 %v904
    %v1168 = vunpack.c.l.b16 %v905
    %v1169 = vunpack.c.l.b16 %v906
    %v1170 = vunpack.c.l.b16 %v907
    %v1171 = vunpack.c.l.b16 %v908
    %v1172 = vunpack.c.l.b16 %v909
    %v1173 = vunpack.c.l.b16 %v910
    %v1174 = vunpack.c.l.b16 %v911
    %v1175 = vunpack.c.l.b16 %v912
    %v1176 = vunpack.c.l.b16 %v913
    %v1177 = vunpack.c.l.b16 %v914
    %v1178 = vunpack.c.l.b16 %v915
    %v1179 = vunpack.c.l.b16 %v916
    %v1180 = vunpack.c.l.b16 %v917
    %v1181 = vunpack.c.l.b16 %v918
    %v1182 = vunpack.c.l.b16 %v919
    %v1183 = vunpack.c.l.b16 %v920
    %v1184 = vunpack.c.l.b16 %v921
    %v1185 = vunpack.c.l.b16 %v922
    %v1186 = vunpack.c.l.b16 %v923
    %v1187 = vunpack.c.l.b16 %v924
    %v1188 = vunpack.c.l.b16 %v925
    %v1189 = vunpack.c.l.b16 %v926
    %v1190 = vunpack.c.l.b16 %v927
    %v1191 = vunpack.c.l.b16 %v928
    %v1192 = vunpack.c.l.b16 %v929
    %v1193 = vunpack.c.l.b16 %v930
    %v1194 = vunpack.c.l.b16 %v931
    %v1195 = vunpack.c.l.b16 %v932
    %v1196 = vunpack.c.l.b16 %v933
    %v1197 = vunpack.c.l.b16 %v934
    %v1198 = vunpack.c.l.b16 %v935
    %v1199 = vunpack.c.l.b16 %v936
    %v1200 = vunpack.c.l.b16 %v937
    %v1201 = vunpack.c.l.b16 %v938
    %v1202 = vunpack.c.l.b16 %v939
    %v1203 = vunpack.c.l.b16 %v940
    %v1204 = vunpack.c.l.b16 %v941
    %v1205 = vunpack.c.l.b16 %v942
    %v1206 = vunpack.c.l.b16 %v943
    %v1207 = vunpack.c.l.b16 %v944
    %v1208 = vunpack.c.l.b16 %v945
    %v1209 = vunpack.c.l.b16 %v946
    %v1210 = vunpack.c.l.b16 %v947
    %v1211 = vunpack.c.l.b16 %v948
    %v1212 = vunpack.c.l.b16 %v949
    %v1213 = vunpack.c.l.b16 %v950
    %v1214 = vunpack.c.l.b16 %v951
    %v1215 = vunpack.c.l.b16 %v952
    %v1216 = vunpack.c.l.b16 %v953
    %v1217 = vunpack.c.l.b16 %v954
    %v1218 = vunpack.c.l.b16 %v955
    %v1219 = vunpack.c.l.b16 %v956
    %v1220 = vpack.c.b16 %v1093, %v1092
    %v1221 = vpack.c.b16 %v1095, %v1094
    %v1222 = vpack.c.b16 %v1097, %v1096
    %v1223 = vpack.c.b16 %v1099, %v1098
    %v1224 = vpack.c.b16 %v1101, %v1100
    %v1225 = vpack.c.b16 %v1103, %v1102
    %v1226 = vpack.c.b16 %v1105, %v1104
    %v1227 = vpack.c.b16 %v1107, %v1106
    %v1228 = vpack.c.b16 %v1109, %v1108
    %v1229 = vpack.c.b16 %v1111, %v1110
    %v1230 = vpack.c.b16 %v1113, %v1112
    %v1231 = vpack.c.b16 %v1115, %v1114
    %v1232 = vpack.c.b16 %v1117, %v1116
    %v1233 = vpack.c.b16 %v1119, %v1118
    %v1234 = vpack.c.b16 %v1121, %v1120
    %v1235 = vpack.c.b16 %v1123, %v1122
    %v1236 = vpack.c.b16 %v1125, %v1124
    %v1237 = vpack.c.b16 %v1127, %v1126
    %v1238 = vpack.c.b16 %v1129, %v1128
    %v1239 = vpack.c.b16 %v1131, %v1130
    %v1240 = vpack.c.b16 %v1133, %v1132
    %v1241 = vpack.c.b16 %v1135, %v1134
    %v1242 = vpack.c.b16 %v1137, %v1136
    %v1243 = vpack.c.b16 %v1139, %v1138
    %v1244 = vpack.c.b16 %v1141, %v1140
    %v1245 = vpack.c.b16 %v1143, %v1142
    %v1246 = vpack.c.b16 %v1145, %v1144
    %v1247 = vpack.c.b16 %v1147, %v1146
    %v1248 = vpack.c.b16 %v1149, %v1148
    %v1249 = vpack.c.b16 %v1151, %v1150
    %v1250 = vpack.c.b16 %v1153, %v1152
    %v1251 = vpack.c.b16 %v1155, %v1154
    %v1252 = vpack.c.b16 %v1157, %v1156
    %v1253 = vpack.c.b16 %v1159, %v1158
    %v1254 = vpack.c.b16 %v1161, %v1160
    %v1255 = vpack.c.b16 %v1163, %v1162
    %v1256 = vpack.c.b16 %v1165, %v1164
    %v1257 = vpack.c.b16 %v1167, %v1166
    %v1258 = vpack.c.b16 %v1169, %v1168
    %v1259 = vpack.c.b16 %v1171, %v1170
    %v1260 = vpack.c.b16 %v1173, %v1172
    %v1261 = vpack.c.b16 %v1175, %v1174
    %v1262 = vpack.c.b16 %v1177, %v1176
    %v1263 = vpack.c.b16 %v1179, %v1178
    %v1264 = vpack.c.b16 %v1181, %v1180
    %v1265 = vpack.c.b16 %v1183, %v1182
    %v1266 = vpack.c.b16 %v1185, %v1184
    %v1267 = vpack.c.b16 %v1187, %v1186
    %v1268 = vpack.c.b16 %v1189, %v1188
    %v1269 = vpack.c.b16 %v1191, %v1190
    %v1270 = vpack.c.b16 %v1193, %v1192
    %v1271 = vpack.c.b16 %v1195, %v1194
    %v1272 = vpack.c.b16 %v1197, %v1196
    %v1273 = vpack.c.b16 %v1199, %v1198
    %v1274 = vpack.c.b16 %v1201, %v1200
    %v1275 = vpack.c.b16 %v1203, %v1202
    %v1276 = vpack.c.b16 %v1205, %v1204
    %v1277 = vpack.c.b16 %v1207, %v1206
    %v1278 = vpack.c.b16 %v1209, %v1208
    %v1279 = vpack.c.b16 %v1211, %v1210
    %v1280 = vpack.c.b16 %v1213, %v1212
    %v1281 = vpack.c.b16 %v1215, %v1214
    %v1282 = vpack.c.b16 %v1217, %v1216
    %v1283 = vpack.c.b16 %v1219, %v1218
    %1348 = vmatprep.subr.bf16.mxu0 0
    %1349 = vmatpush1.bf16.msra.mxu0 %v1220
    %1350 = vmatprep.subr.bf16.mxu0 0
    %1351 = vmatpush1.bf16.msra.mxu0 %v1221
    %1352 = vmatprep.subr.bf16.mxu0 0
    %1353 = vmatpush1.bf16.msra.mxu0 %v1222
    %1354 = vmatprep.subr.bf16.mxu0 0
    %1355 = vmatpush1.bf16.msra.mxu0 %v1223
    %1356 = vmatprep.subr.bf16.mxu0 0
    %1357 = vmatpush1.bf16.msra.mxu0 %v1224
    %1358 = vmatprep.subr.bf16.mxu0 0
    %1359 = vmatpush1.bf16.msra.mxu0 %v1225
    %1360 = vmatprep.subr.bf16.mxu0 0
    %1361 = vmatpush1.bf16.msra.mxu0 %v1226
    %1362 = vmatprep.subr.bf16.mxu0 0
    %1363 = vmatpush1.bf16.msra.mxu0 %v1227
    %1364 = vmatprep.subr.bf16.mxu0 0
    %1365 = vmatpush1.bf16.msra.mxu0 %v1228
    %1366 = vmatprep.subr.bf16.mxu0 0
    %1367 = vmatpush1.bf16.msra.mxu0 %v1229
    %1368 = vmatprep.subr.bf16.mxu0 0
    %1369 = vmatpush1.bf16.msra.mxu0 %v1230
    %1370 = vmatprep.subr.bf16.mxu0 0
    %1371 = vmatpush1.bf16.msra.mxu0 %v1231
    %1372 = vmatprep.subr.bf16.mxu0 0
    %1373 = vmatpush1.bf16.msra.mxu0 %v1232
    %1374 = vmatprep.subr.bf16.mxu0 0
    %1375 = vmatpush1.bf16.msra.mxu0 %v1233
    %1376 = vmatprep.subr.bf16.mxu0 0
    %1377 = vmatpush1.bf16.msra.mxu0 %v1234
    %1378 = vmatprep.subr.bf16.mxu0 0
    %1379 = vmatpush1.bf16.msra.mxu0 %v1235
    %1380 = vmatprep.mubr.bf16.mxu0 %v766
    %1381 = vmatmul.mubr.bf16.gmra.mrb[0].mxu0 %v765
    %v1382 = vpop.f32.mrb[0].mxu0
    %v1383 = vadd.f32 %v962, %v1382
    %v1384 = vpop.f32.mrb[0].mxu0
    %v1385 = vpop.f32.mrb[0].mxu0
    %v1386 = vadd.f32 %v962, %v1385
    %v1387 = vpop.f32.mrb[0].mxu0
    %1388 = vmatprep.mubr.bf16.mxu0 %v774
    %1389 = vmatmul.mubr.bf16.gmra.mrb[0].mxu0 %v773
    %v1390 = vpop.f32.mrb[0].mxu0
    %v1391 = vadd.f32 %v962, %v1390
    %v1392 = vpop.f32.mrb[0].mxu0
    %v1393 = vpop.f32.mrb[0].mxu0
    %v1394 = vadd.f32 %v962, %v1393
    %v1395 = vpop.f32.mrb[0].mxu0
    %1396 = vmatprep.mubr.bf16.mxu0 %v782
    %1397 = vmatmul.mubr.bf16.gmra.mrb[0].mxu0 %v781
    %v1398 = vpop.f32.mrb[0].mxu0
    %v1399 = vadd.f32 %v962, %v1398
    %v1400 = vpop.f32.mrb[0].mxu0
    %v1401 = vpop.f32.mrb[0].mxu0
    %v1402 = vadd.f32 %v962, %v1401
    %v1403 = vpop.f32.mrb[0].mxu0
    %1404 = vmatprep.mubr.bf16.mxu0 %v790
    %1405 = vmatmul.mubr.bf16.gmra.mrb[0].mxu0 %v789
    %v1406 = vpop.f32.mrb[0].mxu0
    %v1407 = vadd.f32 %v962, %v1406
    %v1408 = vpop.f32.mrb[0].mxu0
    %v1409 = vpop.f32.mrb[0].mxu0
    %v1410 = vadd.f32 %v962, %v1409
    %v1411 = vpop.f32.mrb[0].mxu0
    %1412 = vmatprep.mubr.bf16.mxu0 %v798
    %1413 = vmatmul.mubr.bf16.gmra.mrb[0].mxu0 %v797
    %v1414 = vpop.f32.mrb[0].mxu0
    %v1415 = vadd.f32 %v962, %v1414
    %v1416 = vpop.f32.mrb[0].mxu0
    %v1417 = vpop.f32.mrb[0].mxu0
    %v1418 = vadd.f32 %v962, %v1417
    %v1419 = vpop.f32.mrb[0].mxu0
    %1420 = vmatprep.mubr.bf16.mxu0 %v806
    %1421 = vmatmul.mubr.bf16.gmra.mrb[0].mxu0 %v805
    %v1422 = vpop.f32.mrb[0].mxu0
    %v1423 = vadd.f32 %v962, %v1422
    %v1424 = vpop.f32.mrb[0].mxu0
    %v1425 = vpop.f32.mrb[0].mxu0
    %v1426 = vadd.f32 %v962, %v1425
    %v1427 = vpop.f32.mrb[0].mxu0
    %1428 = vmatprep.mubr.bf16.mxu0 %v814
    %1429 = vmatmul.mubr.bf16.gmra.mrb[0].mxu0 %v813
    %v1430 = vpop.f32.mrb[0].mxu0
    %v1431 = vadd.f32 %v962, %v1430
    %v1432 = vpop.f32.mrb[0].mxu0
    %v1433 = vpop.f32.mrb[0].mxu0
    %v1434 = vadd.f32 %v962, %v1433
    %v1435 = vpop.f32.mrb[0].mxu0
    %1436 = vmatprep.mubr.bf16.mxu0 %v822
    %1437 = vmatmul.mubr.bf16.gmra.mrb[0].mxu0 %v821
    %v1438 = vpop.f32.mrb[0].mxu0
    %v1439 = vadd.f32 %v962, %v1438
    %v1440 = vpop.f32.mrb[0].mxu0
    %v1441 = vpop.f32.mrb[0].mxu0
    %v1442 = vadd.f32 %v962, %v1441
    %v1443 = vpop.f32.mrb[0].mxu0
    %1444 = vdwg.mxu0
    %1445 = vmatprep.subr.bf16.mxu0 0
    %1446 = vmatpush1.bf16.msra.mxu0 %v1236
    %1447 = vmatprep.subr.bf16.mxu0 0
    %1448 = vmatpush1.bf16.msra.mxu0 %v1237
    %1449 = vmatprep.subr.bf16.mxu0 0
    %1450 = vmatpush1.bf16.msra.mxu0 %v1238
    %1451 = vmatprep.subr.bf16.mxu0 0
    %1452 = vmatpush1.bf16.msra.mxu0 %v1239
    %1453 = vmatprep.subr.bf16.mxu0 0
    %1454 = vmatpush1.bf16.msra.mxu0 %v1240
    %1455 = vmatprep.subr.bf16.mxu0 0
    %1456 = vmatpush1.bf16.msra.mxu0 %v1241
    %1457 = vmatprep.subr.bf16.mxu0 0
    %1458 = vmatpush1.bf16.msra.mxu0 %v1242
    %1459 = vmatprep.subr.bf16.mxu0 0
    %1460 = vmatpush1.bf16.msra.mxu0 %v1243
    %1461 = vmatprep.subr.bf16.mxu0 0
    %1462 = vmatpush1.bf16.msra.mxu0 %v1244
    %1463 = vmatprep.subr.bf16.mxu0 0
    %1464 = vmatpush1.bf16.msra.mxu0 %v1245
    %1465 = vmatprep.subr.bf16.mxu0 0
    %1466 = vmatpush1.bf16.msra.mxu0 %v1246
    %1467 = vmatprep.subr.bf16.mxu0 0
    %1468 = vmatpush1.bf16.msra.mxu0 %v1247
    %1469 = vmatprep.subr.bf16.mxu0 0
    %1470 = vmatpush1.bf16.msra.mxu0 %v1248
    %1471 = vmatprep.subr.bf16.mxu0 0
    %1472 = vmatpush1.bf16.msra.mxu0 %v1249
    %1473 = vmatprep.subr.bf16.mxu0 0
    %1474 = vmatpush1.bf16.msra.mxu0 %v1250
    %1475 = vmatprep.subr.bf16.mxu0 0
    %1476 = vmatpush1.bf16.msra.mxu0 %v1251
    %1477 = vmatprep.mubr.bf16.mxu0 %v768
    %1478 = vmatmul.mubr.bf16.gmra.mrb[0].mxu0 %v767
    %v1479 = vpop.f32.mrb[0].mxu0
    %v1480 = vadd.f32 %v1383, %v1479
    %v1481 = vpop.f32.mrb[0].mxu0
    %v1482 = vpop.f32.mrb[0].mxu0
    %v1483 = vadd.f32 %v1386, %v1482
    %v1484 = vpop.f32.mrb[0].mxu0
    %1485 = vmatprep.mubr.bf16.mxu0 %v776
    %1486 = vmatmul.mubr.bf16.gmra.mrb[0].mxu0 %v775
    %v1487 = vpop.f32.mrb[0].mxu0
    %v1488 = vadd.f32 %v1391, %v1487
    %v1489 = vpop.f32.mrb[0].mxu0
    %v1490 = vpop.f32.mrb[0].mxu0
    %v1491 = vadd.f32 %v1394, %v1490
    %v1492 = vpop.f32.mrb[0].mxu0
    %1493 = vmatprep.mubr.bf16.mxu0 %v784
    %1494 = vmatmul.mubr.bf16.gmra.mrb[0].mxu0 %v783
    %v1495 = vpop.f32.mrb[0].mxu0
    %v1496 = vadd.f32 %v1399, %v1495
    %v1497 = vpop.f32.mrb[0].mxu0
    %v1498 = vpop.f32.mrb[0].mxu0
    %v1499 = vadd.f32 %v1402, %v1498
    %v1500 = vpop.f32.mrb[0].mxu0
    %1501 = vmatprep.mubr.bf16.mxu0 %v792
    %1502 = vmatmul.mubr.bf16.gmra.mrb[0].mxu0 %v791
    %v1503 = vpop.f32.mrb[0].mxu0
    %v1504 = vadd.f32 %v1407, %v1503
    %v1505 = vpop.f32.mrb[0].mxu0
    %v1506 = vpop.f32.mrb[0].mxu0
    %v1507 = vadd.f32 %v1410, %v1506
    %v1508 = vpop.f32.mrb[0].mxu0
    %1509 = vmatprep.mubr.bf16.mxu0 %v800
    %1510 = vmatmul.mubr.bf16.gmra.mrb[0].mxu0 %v799
    %v1511 = vpop.f32.mrb[0].mxu0
    %v1512 = vadd.f32 %v1415, %v1511
    %v1513 = vpop.f32.mrb[0].mxu0
    %v1514 = vpop.f32.mrb[0].mxu0
    %v1515 = vadd.f32 %v1418, %v1514
    %v1516 = vpop.f32.mrb[0].mxu0
    %1517 = vmatprep.mubr.bf16.mxu0 %v808
    %1518 = vmatmul.mubr.bf16.gmra.mrb[0].mxu0 %v807
    %v1519 = vpop.f32.mrb[0].mxu0
    %v1520 = vadd.f32 %v1423, %v1519
    %v1521 = vpop.f32.mrb[0].mxu0
    %v1522 = vpop.f32.mrb[0].mxu0
    %v1523 = vadd.f32 %v1426, %v1522
    %v1524 = vpop.f32.mrb[0].mxu0
    %1525 = vmatprep.mubr.bf16.mxu0 %v816
    %1526 = vmatmul.mubr.bf16.gmra.mrb[0].mxu0 %v815
    %v1527 = vpop.f32.mrb[0].mxu0
    %v1528 = vadd.f32 %v1431, %v1527
    %v1529 = vpop.f32.mrb[0].mxu0
    %v1530 = vpop.f32.mrb[0].mxu0
    %v1531 = vadd.f32 %v1434, %v1530
    %v1532 = vpop.f32.mrb[0].mxu0
    %1533 = vmatprep.mubr.bf16.mxu0 %v824
    %1534 = vmatmul.mubr.bf16.gmra.mrb[0].mxu0 %v823
    %v1535 = vpop.f32.mrb[0].mxu0
    %v1536 = vadd.f32 %v1439, %v1535
    %v1537 = vpop.f32.mrb[0].mxu0
    %v1538 = vpop.f32.mrb[0].mxu0
    %v1539 = vadd.f32 %v1442, %v1538
    %v1540 = vpop.f32.mrb[0].mxu0
    %1541 = vdwg.mxu0
    %1542 = vmatprep.subr.bf16.mxu0 0
    %1543 = vmatpush1.bf16.msra.mxu0 %v1252
    %1544 = vmatprep.subr.bf16.mxu0 0
    %1545 = vmatpush1.bf16.msra.mxu0 %v1253
    %1546 = vmatprep.subr.bf16.mxu0 0
    %1547 = vmatpush1.bf16.msra.mxu0 %v1254
    %1548 = vmatprep.subr.bf16.mxu0 0
    %1549 = vmatpush1.bf16.msra.mxu0 %v1255
    %1550 = vmatprep.subr.bf16.mxu0 0
    %1551 = vmatpush1.bf16.msra.mxu0 %v1256
    %1552 = vmatprep.subr.bf16.mxu0 0
    %1553 = vmatpush1.bf16.msra.mxu0 %v1257
    %1554 = vmatprep.subr.bf16.mxu0 0
    %1555 = vmatpush1.bf16.msra.mxu0 %v1258
    %1556 = vmatprep.subr.bf16.mxu0 0
    %1557 = vmatpush1.bf16.msra.mxu0 %v1259
    %1558 = vmatprep.subr.bf16.mxu0 0
    %1559 = vmatpush1.bf16.msra.mxu0 %v1260
    %1560 = vmatprep.subr.bf16.mxu0 0
    %1561 = vmatpush1.bf16.msra.mxu0 %v1261
    %1562 = vmatprep.subr.bf16.mxu0 0
    %1563 = vmatpush1.bf16.msra.mxu0 %v1262
    %1564 = vmatprep.subr.bf16.mxu0 0
    %1565 = vmatpush1.bf16.msra.mxu0 %v1263
    %1566 = vmatprep.subr.bf16.mxu0 0
    %1567 = vmatpush1.bf16.msra.mxu0 %v1264
    %1568 = vmatprep.subr.bf16.mxu0 0
    %1569 = vmatpush1.bf16.msra.mxu0 %v1265
    %1570 = vmatprep.subr.bf16.mxu0 0
    %1571 = vmatpush1.bf16.msra.mxu0 %v1266
    %1572 = vmatprep.subr.bf16.mxu0 0
    %1573 = vmatpush1.bf16.msra.mxu0 %v1267
    %1574 = vmatprep.mubr.bf16.mxu0 %v770
    %1575 = vmatmul.mubr.bf16.gmra.mrb[0].mxu0 %v769
    %v1576 = vpop.f32.mrb[0].mxu0
    %v1577 = vadd.f32 %v1480, %v1576
    %v1578 = vpop.f32.mrb[0].mxu0
    %v1579 = vpop.f32.mrb[0].mxu0
    %v1580 = vadd.f32 %v1483, %v1579
    %v1581 = vpop.f32.mrb[0].mxu0
    %1582 = vmatprep.mubr.bf16.mxu0 %v778
    %1583 = vmatmul.mubr.bf16.gmra.mrb[0].mxu0 %v777
    %v1584 = vpop.f32.mrb[0].mxu0
    %v1585 = vadd.f32 %v1488, %v1584
    %v1586 = vpop.f32.mrb[0].mxu0
    %v1587 = vpop.f32.mrb[0].mxu0
    %v1588 = vadd.f32 %v1491, %v1587
    %v1589 = vpop.f32.mrb[0].mxu0
    %1590 = vmatprep.mubr.bf16.mxu0 %v786
    %1591 = vmatmul.mubr.bf16.gmra.mrb[0].mxu0 %v785
    %v1592 = vpop.f32.mrb[0].mxu0
    %v1593 = vadd.f32 %v1496, %v1592
    %v1594 = vpop.f32.mrb[0].mxu0
    %v1595 = vpop.f32.mrb[0].mxu0
    %v1596 = vadd.f32 %v1499, %v1595
    %v1597 = vpop.f32.mrb[0].mxu0
    %1598 = vmatprep.mubr.bf16.mxu0 %v794
    %1599 = vmatmul.mubr.bf16.gmra.mrb[0].mxu0 %v793
    %v1600 = vpop.f32.mrb[0].mxu0
    %v1601 = vadd.f32 %v1504, %v1600
    %v1602 = vpop.f32.mrb[0].mxu0
    %v1603 = vpop.f32.mrb[0].mxu0
    %v1604 = vadd.f32 %v1507, %v1603
    %v1605 = vpop.f32.mrb[0].mxu0
    %1606 = vmatprep.mubr.bf16.mxu0 %v802
    %1607 = vmatmul.mubr.bf16.gmra.mrb[0].mxu0 %v801
    %v1608 = vpop.f32.mrb[0].mxu0
    %v1609 = vadd.f32 %v1512, %v1608
    %v1610 = vpop.f32.mrb[0].mxu0
    %v1611 = vpop.f32.mrb[0].mxu0
    %v1612 = vadd.f32 %v1515, %v1611
    %v1613 = vpop.f32.mrb[0].mxu0
    %1614 = vmatprep.mubr.bf16.mxu0 %v810
    %1615 = vmatmul.mubr.bf16.gmra.mrb[0].mxu0 %v809
    %v1616 = vpop.f32.mrb[0].mxu0
    %v1617 = vadd.f32 %v1520, %v1616
    %v1618 = vpop.f32.mrb[0].mxu0
    %v1619 = vpop.f32.mrb[0].mxu0
    %v1620 = vadd.f32 %v1523, %v1619
    %v1621 = vpop.f32.mrb[0].mxu0
    %1622 = vmatprep.mubr.bf16.mxu0 %v818
    %1623 = vmatmul.mubr.bf16.gmra.mrb[0].mxu0 %v817
    %v1624 = vpop.f32.mrb[0].mxu0
    %v1625 = vadd.f32 %v1528, %v1624
    %v1626 = vpop.f32.mrb[0].mxu0
    %v1627 = vpop.f32.mrb[0].mxu0
    %v1628 = vadd.f32 %v1531, %v1627
    %v1629 = vpop.f32.mrb[0].mxu0
    %1630 = vmatprep.mubr.bf16.mxu0 %v826
    %1631 = vmatmul.mubr.bf16.gmra.mrb[0].mxu0 %v825
    %v1632 = vpop.f32.mrb[0].mxu0
    %v1633 = vadd.f32 %v1536, %v1632
    %v1634 = vpop.f32.mrb[0].mxu0
    %v1635 = vpop.f32.mrb[0].mxu0
    %v1636 = vadd.f32 %v1539, %v1635
    %v1637 = vpop.f32.mrb[0].mxu0
    %1638 = vdwg.mxu0
    %1639 = vmatprep.subr.bf16.mxu0 0
    %1640 = vmatpush1.bf16.msra.mxu0 %v1268
    %1641 = vmatprep.subr.bf16.mxu0 0
    %1642 = vmatpush1.bf16.msra.mxu0 %v1269
    %1643 = vmatprep.subr.bf16.mxu0 0
    %1644 = vmatpush1.bf16.msra.mxu0 %v1270
    %1645 = vmatprep.subr.bf16.mxu0 0
    %1646 = vmatpush1.bf16.msra.mxu0 %v1271
    %1647 = vmatprep.subr.bf16.mxu0 0
    %1648 = vmatpush1.bf16.msra.mxu0 %v1272
    %1649 = vmatprep.subr.bf16.mxu0 0
    %1650 = vmatpush1.bf16.msra.mxu0 %v1273
    %1651 = vmatprep.subr.bf16.mxu0 0
    %1652 = vmatpush1.bf16.msra.mxu0 %v1274
    %1653 = vmatprep.subr.bf16.mxu0 0
    %1654 = vmatpush1.bf16.msra.mxu0 %v1275
    %1655 = vmatprep.subr.bf16.mxu0 0
    %1656 = vmatpush1.bf16.msra.mxu0 %v1276
    %1657 = vmatprep.subr.bf16.mxu0 0
    %1658 = vmatpush1.bf16.msra.mxu0 %v1277
    %1659 = vmatprep.subr.bf16.mxu0 0
    %1660 = vmatpush1.bf16.msra.mxu0 %v1278
    %1661 = vmatprep.subr.bf16.mxu0 0
    %1662 = vmatpush1.bf16.msra.mxu0 %v1279
    %1663 = vmatprep.subr.bf16.mxu0 0
    %1664 = vmatpush1.bf16.msra.mxu0 %v1280
    %1665 = vmatprep.subr.bf16.mxu0 0
    %1666 = vmatpush1.bf16.msra.mxu0 %v1281
    %1667 = vmatprep.subr.bf16.mxu0 0
    %1668 = vmatpush1.bf16.msra.mxu0 %v1282
    %1669 = vmatprep.subr.bf16.mxu0 0
    %1670 = vmatpush1.bf16.msra.mxu0 %v1283
    %1671 = vmatprep.mubr.bf16.mxu0 %v772
    %1672 = vmatmul.mubr.bf16.gmra.mrb[0].mxu0 %v771
    %v1673 = vpop.f32.mrb[0].mxu0
    %v1674 = vadd.f32 %v1577, %v1673
    %v1675 = vpop.f32.mrb[0].mxu0
    %v1676 = vpop.f32.mrb[0].mxu0
    %v1677 = vadd.f32 %v1580, %v1676
    %v1678 = vpop.f32.mrb[0].mxu0
    %1679 = vmatprep.mubr.bf16.mxu0 %v780
    %1680 = vmatmul.mubr.bf16.gmra.mrb[0].mxu0 %v779
    %v1681 = vpop.f32.mrb[0].mxu0
    %v1682 = vadd.f32 %v1585, %v1681
    %v1683 = vpop.f32.mrb[0].mxu0
    %v1684 = vpop.f32.mrb[0].mxu0
    %v1685 = vadd.f32 %v1588, %v1684
    %v1686 = vpop.f32.mrb[0].mxu0
    %1687 = vmatprep.mubr.bf16.mxu0 %v788
    %1688 = vmatmul.mubr.bf16.gmra.mrb[0].mxu0 %v787
    %v1689 = vpop.f32.mrb[0].mxu0
    %v1690 = vadd.f32 %v1593, %v1689
    %v1691 = vpop.f32.mrb[0].mxu0
    %v1692 = vpop.f32.mrb[0].mxu0
    %v1693 = vadd.f32 %v1596, %v1692
    %v1694 = vpop.f32.mrb[0].mxu0
    %1695 = vmatprep.mubr.bf16.mxu0 %v796
    %1696 = vmatmul.mubr.bf16.gmra.mrb[0].mxu0 %v795
    %v1697 = vpop.f32.mrb[0].mxu0
    %v1698 = vadd.f32 %v1601, %v1697
    %v1699 = vpop.f32.mrb[0].mxu0
    %v1700 = vpop.f32.mrb[0].mxu0
    %v1701 = vadd.f32 %v1604, %v1700
    %v1702 = vpop.f32.mrb[0].mxu0
    %1703 = vmatprep.mubr.bf16.mxu0 %v804
    %1704 = vmatmul.mubr.bf16.gmra.mrb[0].mxu0 %v803
    %v1705 = vpop.f32.mrb[0].mxu0
    %v1706 = vadd.f32 %v1609, %v1705
    %v1707 = vpop.f32.mrb[0].mxu0
    %v1708 = vpop.f32.mrb[0].mxu0
    %v1709 = vadd.f32 %v1612, %v1708
    %v1710 = vpop.f32.mrb[0].mxu0
    %1711 = vmatprep.mubr.bf16.mxu0 %v812
    %1712 = vmatmul.mubr.bf16.gmra.mrb[0].mxu0 %v811
    %v1713 = vpop.f32.mrb[0].mxu0
    %v1714 = vadd.f32 %v1617, %v1713
    %v1715 = vpop.f32.mrb[0].mxu0
    %v1716 = vpop.f32.mrb[0].mxu0
    %v1717 = vadd.f32 %v1620, %v1716
    %v1718 = vpop.f32.mrb[0].mxu0
    %1719 = vmatprep.mubr.bf16.mxu0 %v820
    %1720 = vmatmul.mubr.bf16.gmra.mrb[0].mxu0 %v819
    %v1721 = vpop.f32.mrb[0].mxu0
    %v1722 = vadd.f32 %v1625, %v1721
    %v1723 = vpop.f32.mrb[0].mxu0
    %v1724 = vpop.f32.mrb[0].mxu0
    %v1725 = vadd.f32 %v1628, %v1724
    %v1726 = vpop.f32.mrb[0].mxu0
    %1727 = vmatprep.mubr.bf16.mxu0 %v828
    %1728 = vmatmul.mubr.bf16.gmra.mrb[0].mxu0 %v827
    %v1729 = vpop.f32.mrb[0].mxu0
    %v1730 = vadd.f32 %v1633, %v1729
    %v1731 = vpop.f32.mrb[0].mxu0
    %v1732 = vpop.f32.mrb[0].mxu0
    %v1733 = vadd.f32 %v1636, %v1732
    %v1734 = vpop.f32.mrb[0].mxu0
    %1735 = vdwg.mxu0
    %1736 = vxpose.xlu0.b32.start [1/16] %v1674, 128
    %1737 = vxpose.xlu0.b32.cont [2/16] %v1677, 128
    %1738 = vxpose.xlu0.b32.cont [3/16] %v1682, 128
    %1739 = vxpose.xlu0.b32.cont [4/16] %v1685, 128
    %1740 = vxpose.xlu0.b32.cont [5/16] %v1690, 128
    %1741 = vxpose.xlu0.b32.cont [6/16] %v1693, 128
    %1742 = vxpose.xlu0.b32.cont [7/16] %v1698, 128
    %1743 = vxpose.xlu0.b32.cont [8/16] %v1701, 128
    %1744 = vxpose.xlu0.b32.cont [9/16] %v1706, 128
    %1745 = vxpose.xlu0.b32.cont [10/16] %v1709, 128
    %1746 = vxpose.xlu0.b32.cont [11/16] %v1714, 128
    %1747 = vxpose.xlu0.b32.cont [12/16] %v1717, 128
    %1748 = vxpose.xlu0.b32.cont [13/16] %v1722, 128
    %1749 = vxpose.xlu0.b32.cont [14/16] %v1725, 128
    %1750 = vxpose.xlu0.b32.cont [15/16] %v1730, 128
    %1751 = vxpose.xlu0.b32.end [16/16] %v1733, 128
    %v1752 = vpop.trf.xlu0
    %v1753 = vpop.trf.xlu0
    %v1754 = vpop.trf.xlu0
    %v1755 = vpop.trf.xlu0
    %v1756 = vpop.trf.xlu0
    %v1757 = vpop.trf.xlu0
    %v1758 = vpop.trf.xlu0
    %v1759 = vpop.trf.xlu0
    %v1760 = vpop.trf.xlu0
    %v1761 = vpop.trf.xlu0
    %v1762 = vpop.trf.xlu0
    %v1763 = vpop.trf.xlu0
    %v1764 = vpop.trf.xlu0
    %v1765 = vpop.trf.xlu0
    %v1766 = vpop.trf.xlu0
    %v1767 = vpop.trf.xlu0
    %v1768 = vxor.u32 %v1752, 2147483648
    %v1769 = vmul.f32 %v1768, 1.442695
    %v1770 = vpow.pop %v1769
    %v1771 = vadd.f32 %v1770, 1.0
    %v1772 = vrcp.pop %v1771
    %v1773 = vmul.f32 1.0, %v1772
    %1774 = vst [vmem:[%s5] sm:$0x7] %v1773
    // Predicated region
    $region34: #{ac_header_forward.1} parent=1 // pred_check
      _
    $region35: #{ac_header_forward.1} parent=1 // pred_check_branch
      %1776 = sbr.rel (0) target = $region37
    $region36: #{ac_header_forward.1} parent=1 // pred_region
      _
    $region37: #{ac_header_forward.1} parent=1 // pred_fallthru
      _
    // Predicated region
    $region38: #{ac_header_forward.1} parent=1 // pred_check
      _
    $region39: #{ac_header_forward.1} parent=1 // pred_check_branch
      %1778 = sbr.rel (0) target = $region41
    $region40: #{ac_header_forward.1} parent=1 // pred_region
      _
    $region41: #{ac_header_forward.1} parent=1 // pred_fallthru
      _
    %1779 = vsyncpa [#allocation3], 1
    %1780 = vsyncpa [#allocation5], 1

</llo_original>
